<compile_context>
chip_gen: v7x
topology: tpu7x:2x2x1
jax: 0.10.0
libtpu: 0.0.40
codegen_flags: <defaults>
</compile_context>

<pallas_src>
import functools

import jax
import jax.numpy as jnp
from jax import lax
from jax.experimental import pallas as pl
from jax.experimental.pallas import tpu as pltpu


def _round_up(x, m):
    return ((x + m - 1) // m) * m


def _gru_recurrence_kernel(gi_ref, whh_ref, bhn_ref, out_ref, hid_ref, h_scratch, *,
                           seq_len, chunk, unroll):
    """Fused GRU recurrence, pipelined over time chunks.

    Per grid step `t` (time chunk):
      gi_ref  : (chunk, Bp, 3*Hp)  precomputed x @ W_ih^T (+ folded biases) for this chunk
      whh_ref : (Hp, 3*Hp)         gate-major, lane-padded W_hh^T (resident; same block every t)
      bhn_ref : (1, Hp)            hidden bias of the n gate (inside r * (.))
      out_ref : (chunk, Bp, Hp)    per-step hidden states for this chunk
      hid_ref : (Bp, Hp)           final hidden state (written once, on the last grid step)
      h_scratch : (Bp, Hp) VMEM    hidden state carried across grid steps
    """
    t = pl.program_id(0)
    Hp = hid_ref.shape[-1]

    @pl.when(t == 0)
    def _():
        h_scratch[...] = jnp.zeros_like(h_scratch)

    whh = whh_ref[...]          # resident for the whole chunk (and across chunks)
    bhn = bhn_ref[...]
    base = t * chunk

    def step(i, h):
        gi = gi_ref[i]          # (Bp, 3*Hp) — lane-aligned per-gate blocks
        gh = jnp.dot(h, whh, preferred_element_type=jnp.float32)
        r = jax.nn.sigmoid(gi[:, 0 * Hp:1 * Hp] + gh[:, 0 * Hp:1 * Hp])
        z = jax.nn.sigmoid(gi[:, 1 * Hp:2 * Hp] + gh[:, 1 * Hp:2 * Hp])
        n = jnp.tanh(gi[:, 2 * Hp:3 * Hp] + r * (gh[:, 2 * Hp:3 * Hp] + bhn))
        h_new = (1.0 - z) * n + z * h
        # Hold the state for padded time steps of the (possibly partial) last chunk.
        h_new = jnp.where(base + i < seq_len, h_new, h)
        out_ref[i] = h_new      # unmasked, lane-dense store (Hp multiple of 128)
        return h_new

    h = lax.fori_loop(0, chunk, step, h_scratch[...], unroll=unroll)
    h_scratch[...] = h

    @pl.when(t == pl.num_programs(0) - 1)
    def _():
        hid_ref[...] = h        # single final-hidden write


def gru_forward(embedded, w_ih, w_hh, b_ih, b_hh, *, time_chunk=128):
    """embedded: (L, B, E) f32.  PyTorch-layout GRU params:
       w_ih (3H, E), w_hh (3H, H), b_ih (3H,), b_hh (3H,), gate order r, z, n."""
    L, B, E = embedded.shape
    H = w_hh.shape[1]
    Hp = _round_up(H, 128)      # each gate padded to a full 128-lane block
    Bp = _round_up(B, 8)        # sublane-aligned batch

    f32 = jnp.float32
    w_ih_g = w_ih.reshape(3, H, E).astype(f32)
    w_hh_g = w_hh.reshape(3, H, H).astype(f32)
    b_ih_g = b_ih.reshape(3, H).astype(f32)
    b_hh_g = b_hh.reshape(3, H).astype(f32)

    # Gate-major, lane-padded transposed weights: columns [g*Hp : g*Hp+H] hold gate g.
    wih_t = jnp.pad(jnp.transpose(w_ih_g, (0, 2, 1)), ((0, 0), (0, 0), (0, Hp - H)))        # (3, E, Hp)
    wih_t = jnp.transpose(wih_t, (1, 0, 2)).reshape(E, 3 * Hp)                              # (E, 3*Hp)
    whh_t = jnp.pad(jnp.transpose(w_hh_g, (0, 2, 1)), ((0, 0), (0, Hp - H), (0, Hp - H)))   # (3, Hp, Hp)
    whh_t = jnp.transpose(whh_t, (1, 0, 2)).reshape(Hp, 3 * Hp)                             # (Hp, 3*Hp)

    # Fold b_hh into the input-side bias for r and z; keep b_hn separate
    # (PyTorch: n = tanh(W_in x + b_in + r * (W_hn h + b_hn))).
    b_fold = b_ih_g + b_hh_g * jnp.array([1.0, 1.0, 0.0], f32)[:, None]                     # (3, H)
    bias = jnp.pad(b_fold, ((0, 0), (0, Hp - H))).reshape(3 * Hp)                           # (3*Hp,)
    bhn = jnp.pad(b_hh_g[2:3], ((0, 0), (0, Hp - H)))                                       # (1, Hp)

    # Hoisted input projection for ALL timesteps: one big MXU-shaped matmul (JAX glue).
    emb_pad = jnp.pad(embedded.astype(f32), ((0, 0), (0, Bp - B), (0, 0)))                  # (L, Bp, E)
    gi = (emb_pad.reshape(L * Bp, E) @ wih_t + bias).reshape(L, Bp, 3 * Hp)

    # Time chunking: stream gi/out through VMEM in chunks (double-buffered by Pallas).
    tc = min(L, time_chunk)
    num_chunks = pl.cdiv(L, tc)
    Lp = num_chunks * tc
    if Lp != L:
        gi = jnp.pad(gi, ((0, Lp - L), (0, 0), (0, 0)))                                     # (Lp, Bp, 3*Hp)

    kernel = functools.partial(
        _gru_recurrence_kernel, seq_len=L, chunk=tc,
        unroll=True if tc <= 32 else 8)

    grid_spec = pltpu.PrefetchScalarGridSpec(
        num_scalar_prefetch=0,
        grid=(num_chunks,),
        in_specs=[
            pl.BlockSpec((tc, Bp, 3 * Hp), lambda t: (t, 0, 0)),   # gi, streamed per chunk
            pl.BlockSpec((Hp, 3 * Hp), lambda t: (0, 0)),          # W_hh^T, resident
            pl.BlockSpec((1, Hp), lambda t: (0, 0)),               # b_hn, resident
        ],
        out_specs=(
            pl.BlockSpec((tc, Bp, Hp), lambda t: (t, 0, 0)),       # per-step hidden states
            pl.BlockSpec((Bp, Hp), lambda t: (0, 0)),              # final hidden (last step)
        ),
        scratch_shapes=[pltpu.VMEM((Bp, Hp), f32)],                # carried hidden state
    )

    outputs_p, hidden_p = pl.pallas_call(
        kernel,
        out_shape=(
            jax.ShapeDtypeStruct((Lp, Bp, Hp), f32),
            jax.ShapeDtypeStruct((Bp, Hp), f32),
        ),
        grid_spec=grid_spec,
        compiler_params=pltpu.CompilerParams(
            dimension_semantics=("arbitrary",)),   # recurrence: sequential over time chunks
    )(gi, whh_t, bhn)
    # TODO(synk): for very large H (or v7x 64 MiB VMEM), cast weights + gi to bf16 (f32
    #             accumulate) and tile the hidden dim; at these shapes f32 fits easily.

    return outputs_p[:L, :B, :H], hidden_p[None, :B, :H]


class EncoderPallas:
    """Mirror of the PyTorch Encoder (Embedding + GRU). Dropout is identity (eval mode)."""

    def __init__(self, input_dim, emb_dim, hid_dim, dropout, key):
        self.input_dim = input_dim
        self.emb_dim = emb_dim
        self.hid_dim = hid_dim
        self.dropout = dropout  # TODO(synk): training-mode dropout (random mask) not applied; eval semantics.

        k_emb, k_wih, k_whh, k_bih, k_bhh = jax.random.split(key, 5)
        bound = 1.0 / float(hid_dim) ** 0.5

        # nn.Embedding default init: N(0, 1)
        self.emb_table = jax.random.normal(k_emb, (input_dim, emb_dim), jnp.float32)
        # nn.GRU params, PyTorch layout, gate order (r, z, n), U(-1/sqrt(H), 1/sqrt(H)).
        self.w_ih = jax.random.uniform(k_wih, (3 * hid_dim, emb_dim), jnp.float32, -bound, bound)
        self.w_hh = jax.random.uniform(k_whh, (3 * hid_dim, hid_dim), jnp.float32, -bound, bound)
        self.b_ih = jax.random.uniform(k_bih, (3 * hid_dim,), jnp.float32, -bound, bound)
        self.b_hh = jax.random.uniform(k_bhh, (3 * hid_dim,), jnp.float32, -bound, bound)

    def __call__(self, src):
        # src: (L, B) int32
        embedded = self.emb_table[src]            # (L, B, E) — embedding gather is JAX glue
        # dropout: identity in eval mode
        return gru_forward(embedded, self.w_ih, self.w_hh, self.b_ih, self.b_hh)


def _reference_gru(embedded, w_ih, w_hh, b_ih, b_hh):
    """Pure-JAX reference with exact PyTorch nn.GRU semantics."""
    L, B, E = embedded.shape
    H = w_hh.shape[1]

    def step(h, x):
        gi = x @ w_ih.T + b_ih
        gh = h @ w_hh.T + b_hh
        r = jax.nn.sigmoid(gi[:, :H] + gh[:, :H])
        z = jax.nn.sigmoid(gi[:, H:2 * H] + gh[:, H:2 * H])
        n = jnp.tanh(gi[:, 2 * H:] + r * gh[:, 2 * H:])
        h_new = (1.0 - z) * n + z * h
        return h_new, h_new

    h0 = jnp.zeros((B, H), jnp.float32)
    h_last, outs = jax.lax.scan(step, h0, embedded)
    return outs, h_last[None]


if __name__ == "__main__":
    # Small shapes consistent with the module: vocab=16, emb=32, hid=32, L=8, B=8.
    INPUT_DIM, EMB_DIM, HID_DIM, DROPOUT = 16, 32, 32, 0.0
    SEQ_LEN, BATCH = 8, 8

    key = jax.random.PRNGKey(0)
    k_params, k_src, k_long = jax.random.split(key, 3)

    enc = EncoderPallas(INPUT_DIM, EMB_DIM, HID_DIM, DROPOUT, k_params)
    src = jax.random.randint(k_src, (SEQ_LEN, BATCH), 0, INPUT_DIM, dtype=jnp.int32)

    outputs, hidden = enc(src)
    outputs, hidden = jax.block_until_ready((outputs, hidden))

    assert outputs.shape == (SEQ_LEN, BATCH, HID_DIM)
    assert hidden.shape == (1, BATCH, HID_DIM)

    # Correctness check against the pure-JAX PyTorch-semantics reference.
    embedded = enc.emb_table[src]
    ref_out, ref_hid = _reference_gru(embedded, enc.w_ih, enc.w_hh, enc.b_ih, enc.b_hh)
    assert jnp.allclose(outputs, ref_out, atol=1e-5, rtol=1e-5)
    assert jnp.allclose(hidden, ref_hid, atol=1e-5, rtol=1e-5)

    # Second check exercising the multi-chunk pipelined path (partial last chunk,
    # non-128 hidden size, ragged batch) against the same reference.
    L2, B2, E2, H2, V2 = 300, 5, 20, 48, 16
    enc2 = EncoderPallas(V2, E2, H2, 0.0, jax.random.fold_in(k_params, 1))
    src2 = jax.random.randint(k_long, (L2, B2), 0, V2, dtype=jnp.int32)
    out2, hid2 = jax.block_until_ready(enc2(src2))
    emb2 = enc2.emb_table[src2]
    ref_out2, ref_hid2 = _reference_gru(emb2, enc2.w_ih, enc2.w_hh, enc2.b_ih, enc2.b_hh)
    assert out2.shape == (L2, B2, H2) and hid2.shape == (1, B2, H2)
    assert jnp.allclose(out2, ref_out2, atol=1e-4, rtol=1e-4)
    assert jnp.allclose(hid2, ref_hid2, atol=1e-4, rtol=1e-4)

    print("KERNEL_OK")
</pallas_src>

<mosaic_0001>
module attributes {stable_mosaic.version = 11 : i64} {
  func.func @_gru_recurrence_kernel(%arg0: i32, %arg1: memref<8x8x384xf32, #tpu.memory_space<vmem>>, %arg2: memref<128x384xf32, #tpu.memory_space<vmem>>, %arg3: memref<1x128xf32, #tpu.memory_space<vmem>>, %arg4: memref<8x8x128xf32, #tpu.memory_space<vmem>>, %arg5: memref<8x128xf32, #tpu.memory_space<vmem>>, %arg6: memref<8x128xf32, #tpu.memory_space<vmem>>) attributes {dimension_semantics = [#tpu.dimension_semantics<arbitrary>], iteration_bounds = array<i64: 1>, scalar_prefetch = 0 : i64, scratch_operands = 1 : i64, tpu.core_type = #tpu.core_type<tc>, window_params = [{transform_indices = @transform_0, window_bounds = array<i64: 8, 8, 384>}, {pipeline_mode = #tpu.pipeline_mode<synchronous>, transform_indices = @transform_1, window_bounds = array<i64: 128, 384>}, {pipeline_mode = #tpu.pipeline_mode<synchronous>, transform_indices = @transform_2, window_bounds = array<i64: 1, 128>}, {transform_indices = @transform_3, window_bounds = array<i64: 8, 8, 128>}, {pipeline_mode = #tpu.pipeline_mode<synchronous>, transform_indices = @transform_4, window_bounds = array<i64: 8, 128>}]} {
    %c0_i32 = arith.constant 0 : i32
    %0 = arith.cmpi eq, %arg0, %c0_i32 : i32
    %1 = arith.extui %0 : i1 to i32
    %c0_i32_0 = arith.constant 0 : i32
    %2 = arith.cmpi ne, %1, %c0_i32_0 : i32
    scf.if %2 {
      %cst_83 = arith.constant 0.000000e+00 : f32
      %323 = vector.broadcast %cst_83 : f32 to vector<8x128xf32>
      %c0_84 = arith.constant 0 : index
      %c0_85 = arith.constant 0 : index
      %324 = vector.load %arg6[%c0_84, %c0_85] : memref<8x128xf32, #tpu.memory_space<vmem>>, vector<8x128xf32>
      tpu.vector_store %arg6[%c0_84, %c0_85], %323 {strides = array<i32>} : memref<8x128xf32, #tpu.memory_space<vmem>>, vector<8x128xf32>,
    } else {
    }
    %c0 = arith.constant 0 : index
    %c0_1 = arith.constant 0 : index
    %3 = vector.load %arg2[%c0, %c0_1] : memref<128x384xf32, #tpu.memory_space<vmem>>, vector<128x384xf32>
    %c0_2 = arith.constant 0 : index
    %c0_3 = arith.constant 0 : index
    %4 = vector.load %arg3[%c0_2, %c0_3] : memref<1x128xf32, #tpu.memory_space<vmem>>, vector<1x128xf32>
    %c8_i32 = arith.constant 8 : i32
    %5 = arith.muli %arg0, %c8_i32 : i32
    %c0_4 = arith.constant 0 : index
    %c0_5 = arith.constant 0 : index
    %6 = vector.load %arg6[%c0_4, %c0_5] : memref<8x128xf32, #tpu.memory_space<vmem>>, vector<8x128xf32>
    %c0_i32_6 = arith.constant 0 : i32
    %7 = arith.index_cast %c0_i32_6 : i32 to index
    %c0_7 = arith.constant 0 : index
    %c0_8 = arith.constant 0 : index
    %8 = vector.load %arg1[%7, %c0_7, %c0_8] : memref<8x8x384xf32, #tpu.memory_space<vmem>>, vector<1x8x384xf32>
    %9 = vector.shape_cast %8 : vector<1x8x384xf32> to vector<8x384xf32>
    %cst = arith.constant dense<0.000000e+00> : vector<8x384xf32>
    %10 = tpu.matmul %6, %3, %cst {dimension_numbers = #tpu.dot_dimension_numbers<[1], [0], [0], [1], [0, 0, 1, 1], [], []>} : vector<8x128xf32>, vector<128x384xf32>, vector<8x384xf32> -> vector<8x384xf32>
    %11 = vector.extract_strided_slice %9 {offsets = [0, 0], sizes = [8, 128], strides = [1, 1]} : vector<8x384xf32> to vector<8x128xf32>
    %12 = vector.extract_strided_slice %10 {offsets = [0, 0], sizes = [8, 128], strides = [1, 1]} : vector<8x384xf32> to vector<8x128xf32>
    %13 = arith.addf %11, %12 : vector<8x128xf32>
    %14 = arith.negf %13 : vector<8x128xf32>
    %15 = math.exp %14 : vector<8x128xf32>
    %cst_9 = arith.constant 1.000000e+00 : f32
    %16 = vector.broadcast %cst_9 : f32 to vector<8x128xf32>
    %17 = arith.addf %16, %15 : vector<8x128xf32>
    %18 = arith.divf %16, %17 : vector<8x128xf32>
    %19 = vector.extract_strided_slice %9 {offsets = [0, 128], sizes = [8, 128], strides = [1, 1]} : vector<8x384xf32> to vector<8x128xf32>
    %20 = vector.extract_strided_slice %10 {offsets = [0, 128], sizes = [8, 128], strides = [1, 1]} : vector<8x384xf32> to vector<8x128xf32>
    %21 = arith.addf %19, %20 : vector<8x128xf32>
    %22 = arith.negf %21 : vector<8x128xf32>
    %23 = math.exp %22 : vector<8x128xf32>
    %cst_10 = arith.constant 1.000000e+00 : f32
    %24 = vector.broadcast %cst_10 : f32 to vector<8x128xf32>
    %25 = arith.addf %24, %23 : vector<8x128xf32>
    %26 = arith.divf %24, %25 : vector<8x128xf32>
    %27 = vector.extract_strided_slice %9 {offsets = [0, 256], sizes = [8, 128], strides = [1, 1]} : vector<8x384xf32> to vector<8x128xf32>
    %28 = vector.extract_strided_slice %10 {offsets = [0, 256], sizes = [8, 128], strides = [1, 1]} : vector<8x384xf32> to vector<8x128xf32>
    %29 = vector.broadcast %4 : vector<1x128xf32> to vector<8x128xf32>
    %30 = arith.addf %28, %29 : vector<8x128xf32>
    %31 = arith.mulf %18, %30 : vector<8x128xf32>
    %32 = arith.addf %27, %31 : vector<8x128xf32>
    %33 = math.tanh %32 : vector<8x128xf32>
    %cst_11 = arith.constant 1.000000e+00 : f32
    %34 = vector.broadcast %cst_11 : f32 to vector<8x128xf32>
    %35 = arith.subf %34, %26 : vector<8x128xf32>
    %36 = arith.mulf %35, %33 : vector<8x128xf32>
    %37 = arith.mulf %26, %6 : vector<8x128xf32>
    %38 = arith.addf %36, %37 : vector<8x128xf32>
    %39 = arith.addi %5, %c0_i32_6 : i32
    %c8_i32_12 = arith.constant 8 : i32
    %40 = arith.cmpi slt, %39, %c8_i32_12 : i32
    %41 = arith.select %40, %38, %6 : vector<8x128xf32>
    %42 = arith.index_cast %c0_i32_6 : i32 to index
    %c0_13 = arith.constant 0 : index
    %c0_14 = arith.constant 0 : index
    %43 = vector.load %arg4[%42, %c0_13, %c0_14] : memref<8x8x128xf32, #tpu.memory_space<vmem>>, vector<1x8x128xf32>
    %44 = vector.shape_cast %43 : vector<1x8x128xf32> to vector<8x128xf32>
    %45 = vector.shape_cast %41 : vector<8x128xf32> to vector<1x8x128xf32>
    tpu.vector_store %arg4[%42, %c0_13, %c0_14], %45 {strides = array<i32>} : memref<8x8x128xf32, #tpu.memory_space<vmem>>, vector<1x8x128xf32>,
    %c1_i32 = arith.constant 1 : i32
    %46 = arith.index_cast %c1_i32 : i32 to index
    %c0_15 = arith.constant 0 : index
    %c0_16 = arith.constant 0 : index
    %47 = vector.load %arg1[%46, %c0_15, %c0_16] : memref<8x8x384xf32, #tpu.memory_space<vmem>>, vector<1x8x384xf32>
    %48 = vector.shape_cast %47 : vector<1x8x384xf32> to vector<8x384xf32>
    %cst_17 = arith.constant dense<0.000000e+00> : vector<8x384xf32>
    %49 = tpu.matmul %41, %3, %cst_17 {dimension_numbers = #tpu.dot_dimension_numbers<[1], [0], [0], [1], [0, 0, 1, 1], [], []>} : vector<8x128xf32>, vector<128x384xf32>, vector<8x384xf32> -> vector<8x384xf32>
    %50 = vector.extract_strided_slice %48 {offsets = [0, 0], sizes = [8, 128], strides = [1, 1]} : vector<8x384xf32> to vector<8x128xf32>
    %51 = vector.extract_strided_slice %49 {offsets = [0, 0], sizes = [8, 128], strides = [1, 1]} : vector<8x384xf32> to vector<8x128xf32>
    %52 = arith.addf %50, %51 : vector<8x128xf32>
    %53 = arith.negf %52 : vector<8x128xf32>
    %54 = math.exp %53 : vector<8x128xf32>
    %cst_18 = arith.constant 1.000000e+00 : f32
    %55 = vector.broadcast %cst_18 : f32 to vector<8x128xf32>
    %56 = arith.addf %55, %54 : vector<8x128xf32>
    %57 = arith.divf %55, %56 : vector<8x128xf32>
    %58 = vector.extract_strided_slice %48 {offsets = [0, 128], sizes = [8, 128], strides = [1, 1]} : vector<8x384xf32> to vector<8x128xf32>
    %59 = vector.extract_strided_slice %49 {offsets = [0, 128], sizes = [8, 128], strides = [1, 1]} : vector<8x384xf32> to vector<8x128xf32>
    %60 = arith.addf %58, %59 : vector<8x128xf32>
    %61 = arith.negf %60 : vector<8x128xf32>
    %62 = math.exp %61 : vector<8x128xf32>
    %cst_19 = arith.constant 1.000000e+00 : f32
    %63 = vector.broadcast %cst_19 : f32 to vector<8x128xf32>
    %64 = arith.addf %63, %62 : vector<8x128xf32>
    %65 = arith.divf %63, %64 : vector<8x128xf32>
    %66 = vector.extract_strided_slice %48 {offsets = [0, 256], sizes = [8, 128], strides = [1, 1]} : vector<8x384xf32> to vector<8x128xf32>
    %67 = vector.extract_strided_slice %49 {offsets = [0, 256], sizes = [8, 128], strides = [1, 1]} : vector<8x384xf32> to vector<8x128xf32>
    %68 = vector.broadcast %4 : vector<1x128xf32> to vector<8x128xf32>
    %69 = arith.addf %67, %68 : vector<8x128xf32>
    %70 = arith.mulf %57, %69 : vector<8x128xf32>
    %71 = arith.addf %66, %70 : vector<8x128xf32>
    %72 = math.tanh %71 : vector<8x128xf32>
    %cst_20 = arith.constant 1.000000e+00 : f32
    %73 = vector.broadcast %cst_20 : f32 to vector<8x128xf32>
    %74 = arith.subf %73, %65 : vector<8x128xf32>
    %75 = arith.mulf %74, %72 : vector<8x128xf32>
    %76 = arith.mulf %65, %41 : vector<8x128xf32>
    %77 = arith.addf %75, %76 : vector<8x128xf32>
    %78 = arith.addi %5, %c1_i32 : i32
    %c8_i32_21 = arith.constant 8 : i32
    %79 = arith.cmpi slt, %78, %c8_i32_21 : i32
    %80 = arith.select %79, %77, %41 : vector<8x128xf32>
    %81 = arith.index_cast %c1_i32 : i32 to index
    %c0_22 = arith.constant 0 : index
    %c0_23 = arith.constant 0 : index
    %82 = vector.load %arg4[%81, %c0_22, %c0_23] : memref<8x8x128xf32, #tpu.memory_space<vmem>>, vector<1x8x128xf32>
    %83 = vector.shape_cast %82 : vector<1x8x128xf32> to vector<8x128xf32>
    %84 = vector.shape_cast %80 : vector<8x128xf32> to vector<1x8x128xf32>
    tpu.vector_store %arg4[%81, %c0_22, %c0_23], %84 {strides = array<i32>} : memref<8x8x128xf32, #tpu.memory_space<vmem>>, vector<1x8x128xf32>,
    %c2_i32 = arith.constant 2 : i32
    %85 = arith.index_cast %c2_i32 : i32 to index
    %c0_24 = arith.constant 0 : index
    %c0_25 = arith.constant 0 : index
    %86 = vector.load %arg1[%85, %c0_24, %c0_25] : memref<8x8x384xf32, #tpu.memory_space<vmem>>, vector<1x8x384xf32>
    %87 = vector.shape_cast %86 : vector<1x8x384xf32> to vector<8x384xf32>
    %cst_26 = arith.constant dense<0.000000e+00> : vector<8x384xf32>
    %88 = tpu.matmul %80, %3, %cst_26 {dimension_numbers = #tpu.dot_dimension_numbers<[1], [0], [0], [1], [0, 0, 1, 1], [], []>} : vector<8x128xf32>, vector<128x384xf32>, vector<8x384xf32> -> vector<8x384xf32>
    %89 = vector.extract_strided_slice %87 {offsets = [0, 0], sizes = [8, 128], strides = [1, 1]} : vector<8x384xf32> to vector<8x128xf32>
    %90 = vector.extract_strided_slice %88 {offsets = [0, 0], sizes = [8, 128], strides = [1, 1]} : vector<8x384xf32> to vector<8x128xf32>
    %91 = arith.addf %89, %90 : vector<8x128xf32>
    %92 = arith.negf %91 : vector<8x128xf32>
    %93 = math.exp %92 : vector<8x128xf32>
    %cst_27 = arith.constant 1.000000e+00 : f32
    %94 = vector.broadcast %cst_27 : f32 to vector<8x128xf32>
    %95 = arith.addf %94, %93 : vector<8x128xf32>
    %96 = arith.divf %94, %95 : vector<8x128xf32>
    %97 = vector.extract_strided_slice %87 {offsets = [0, 128], sizes = [8, 128], strides = [1, 1]} : vector<8x384xf32> to vector<8x128xf32>
    %98 = vector.extract_strided_slice %88 {offsets = [0, 128], sizes = [8, 128], strides = [1, 1]} : vector<8x384xf32> to vector<8x128xf32>
    %99 = arith.addf %97, %98 : vector<8x128xf32>
    %100 = arith.negf %99 : vector<8x128xf32>
    %101 = math.exp %100 : vector<8x128xf32>
    %cst_28 = arith.constant 1.000000e+00 : f32
    %102 = vector.broadcast %cst_28 : f32 to vector<8x128xf32>
    %103 = arith.addf %102, %101 : vector<8x128xf32>
    %104 = arith.divf %102, %103 : vector<8x128xf32>
    %105 = vector.extract_strided_slice %87 {offsets = [0, 256], sizes = [8, 128], strides = [1, 1]} : vector<8x384xf32> to vector<8x128xf32>
    %106 = vector.extract_strided_slice %88 {offsets = [0, 256], sizes = [8, 128], strides = [1, 1]} : vector<8x384xf32> to vector<8x128xf32>
    %107 = vector.broadcast %4 : vector<1x128xf32> to vector<8x128xf32>
    %108 = arith.addf %106, %107 : vector<8x128xf32>
    %109 = arith.mulf %96, %108 : vector<8x128xf32>
    %110 = arith.addf %105, %109 : vector<8x128xf32>
    %111 = math.tanh %110 : vector<8x128xf32>
    %cst_29 = arith.constant 1.000000e+00 : f32
    %112 = vector.broadcast %cst_29 : f32 to vector<8x128xf32>
    %113 = arith.subf %112, %104 : vector<8x128xf32>
    %114 = arith.mulf %113, %111 : vector<8x128xf32>
    %115 = arith.mulf %104, %80 : vector<8x128xf32>
    %116 = arith.addf %114, %115 : vector<8x128xf32>
    %117 = arith.addi %5, %c2_i32 : i32
    %c8_i32_30 = arith.constant 8 : i32
    %118 = arith.cmpi slt, %117, %c8_i32_30 : i32
    %119 = arith.select %118, %116, %80 : vector<8x128xf32>
    %120 = arith.index_cast %c2_i32 : i32 to index
    %c0_31 = arith.constant 0 : index
    %c0_32 = arith.constant 0 : index
    %121 = vector.load %arg4[%120, %c0_31, %c0_32] : memref<8x8x128xf32, #tpu.memory_space<vmem>>, vector<1x8x128xf32>
    %122 = vector.shape_cast %121 : vector<1x8x128xf32> to vector<8x128xf32>
    %123 = vector.shape_cast %119 : vector<8x128xf32> to vector<1x8x128xf32>
    tpu.vector_store %arg4[%120, %c0_31, %c0_32], %123 {strides = array<i32>} : memref<8x8x128xf32, #tpu.memory_space<vmem>>, vector<1x8x128xf32>,
    %c3_i32 = arith.constant 3 : i32
    %124 = arith.index_cast %c3_i32 : i32 to index
    %c0_33 = arith.constant 0 : index
    %c0_34 = arith.constant 0 : index
    %125 = vector.load %arg1[%124, %c0_33, %c0_34] : memref<8x8x384xf32, #tpu.memory_space<vmem>>, vector<1x8x384xf32>
    %126 = vector.shape_cast %125 : vector<1x8x384xf32> to vector<8x384xf32>
    %cst_35 = arith.constant dense<0.000000e+00> : vector<8x384xf32>
    %127 = tpu.matmul %119, %3, %cst_35 {dimension_numbers = #tpu.dot_dimension_numbers<[1], [0], [0], [1], [0, 0, 1, 1], [], []>} : vector<8x128xf32>, vector<128x384xf32>, vector<8x384xf32> -> vector<8x384xf32>
    %128 = vector.extract_strided_slice %126 {offsets = [0, 0], sizes = [8, 128], strides = [1, 1]} : vector<8x384xf32> to vector<8x128xf32>
    %129 = vector.extract_strided_slice %127 {offsets = [0, 0], sizes = [8, 128], strides = [1, 1]} : vector<8x384xf32> to vector<8x128xf32>
    %130 = arith.addf %128, %129 : vector<8x128xf32>
    %131 = arith.negf %130 : vector<8x128xf32>
    %132 = math.exp %131 : vector<8x128xf32>
    %cst_36 = arith.constant 1.000000e+00 : f32
    %133 = vector.broadcast %cst_36 : f32 to vector<8x128xf32>
    %134 = arith.addf %133, %132 : vector<8x128xf32>
    %135 = arith.divf %133, %134 : vector<8x128xf32>
    %136 = vector.extract_strided_slice %126 {offsets = [0, 128], sizes = [8, 128], strides = [1, 1]} : vector<8x384xf32> to vector<8x128xf32>
    %137 = vector.extract_strided_slice %127 {offsets = [0, 128], sizes = [8, 128], strides = [1, 1]} : vector<8x384xf32> to vector<8x128xf32>
    %138 = arith.addf %136, %137 : vector<8x128xf32>
    %139 = arith.negf %138 : vector<8x128xf32>
    %140 = math.exp %139 : vector<8x128xf32>
    %cst_37 = arith.constant 1.000000e+00 : f32
    %141 = vector.broadcast %cst_37 : f32 to vector<8x128xf32>
    %142 = arith.addf %141, %140 : vector<8x128xf32>
    %143 = arith.divf %141, %142 : vector<8x128xf32>
    %144 = vector.extract_strided_slice %126 {offsets = [0, 256], sizes = [8, 128], strides = [1, 1]} : vector<8x384xf32> to vector<8x128xf32>
    %145 = vector.extract_strided_slice %127 {offsets = [0, 256], sizes = [8, 128], strides = [1, 1]} : vector<8x384xf32> to vector<8x128xf32>
    %146 = vector.broadcast %4 : vector<1x128xf32> to vector<8x128xf32>
    %147 = arith.addf %145, %146 : vector<8x128xf32>
    %148 = arith.mulf %135, %147 : vector<8x128xf32>
    %149 = arith.addf %144, %148 : vector<8x128xf32>
    %150 = math.tanh %149 : vector<8x128xf32>
    %cst_38 = arith.constant 1.000000e+00 : f32
    %151 = vector.broadcast %cst_38 : f32 to vector<8x128xf32>
    %152 = arith.subf %151, %143 : vector<8x128xf32>
    %153 = arith.mulf %152, %150 : vector<8x128xf32>
    %154 = arith.mulf %143, %119 : vector<8x128xf32>
    %155 = arith.addf %153, %154 : vector<8x128xf32>
    %156 = arith.addi %5, %c3_i32 : i32
    %c8_i32_39 = arith.constant 8 : i32
    %157 = arith.cmpi slt, %156, %c8_i32_39 : i32
    %158 = arith.select %157, %155, %119 : vector<8x128xf32>
    %159 = arith.index_cast %c3_i32 : i32 to index
    %c0_40 = arith.constant 0 : index
    %c0_41 = arith.constant 0 : index
    %160 = vector.load %arg4[%159, %c0_40, %c0_41] : memref<8x8x128xf32, #tpu.memory_space<vmem>>, vector<1x8x128xf32>
    %161 = vector.shape_cast %160 : vector<1x8x128xf32> to vector<8x128xf32>
    %162 = vector.shape_cast %158 : vector<8x128xf32> to vector<1x8x128xf32>
    tpu.vector_store %arg4[%159, %c0_40, %c0_41], %162 {strides = array<i32>} : memref<8x8x128xf32, #tpu.memory_space<vmem>>, vector<1x8x128xf32>,
    %c4_i32 = arith.constant 4 : i32
    %163 = arith.index_cast %c4_i32 : i32 to index
    %c0_42 = arith.constant 0 : index
    %c0_43 = arith.constant 0 : index
    %164 = vector.load %arg1[%163, %c0_42, %c0_43] : memref<8x8x384xf32, #tpu.memory_space<vmem>>, vector<1x8x384xf32>
    %165 = vector.shape_cast %164 : vector<1x8x384xf32> to vector<8x384xf32>
    %cst_44 = arith.constant dense<0.000000e+00> : vector<8x384xf32>
    %166 = tpu.matmul %158, %3, %cst_44 {dimension_numbers = #tpu.dot_dimension_numbers<[1], [0], [0], [1], [0, 0, 1, 1], [], []>} : vector<8x128xf32>, vector<128x384xf32>, vector<8x384xf32> -> vector<8x384xf32>
    %167 = vector.extract_strided_slice %165 {offsets = [0, 0], sizes = [8, 128], strides = [1, 1]} : vector<8x384xf32> to vector<8x128xf32>
    %168 = vector.extract_strided_slice %166 {offsets = [0, 0], sizes = [8, 128], strides = [1, 1]} : vector<8x384xf32> to vector<8x128xf32>
    %169 = arith.addf %167, %168 : vector<8x128xf32>
    %170 = arith.negf %169 : vector<8x128xf32>
    %171 = math.exp %170 : vector<8x128xf32>
    %cst_45 = arith.constant 1.000000e+00 : f32
    %172 = vector.broadcast %cst_45 : f32 to vector<8x128xf32>
    %173 = arith.addf %172, %171 : vector<8x128xf32>
    %174 = arith.divf %172, %173 : vector<8x128xf32>
    %175 = vector.extract_strided_slice %165 {offsets = [0, 128], sizes = [8, 128], strides = [1, 1]} : vector<8x384xf32> to vector<8x128xf32>
    %176 = vector.extract_strided_slice %166 {offsets = [0, 128], sizes = [8, 128], strides = [1, 1]} : vector<8x384xf32> to vector<8x128xf32>
    %177 = arith.addf %175, %176 : vector<8x128xf32>
    %178 = arith.negf %177 : vector<8x128xf32>
    %179 = math.exp %178 : vector<8x128xf32>
    %cst_46 = arith.constant 1.000000e+00 : f32
    %180 = vector.broadcast %cst_46 : f32 to vector<8x128xf32>
    %181 = arith.addf %180, %179 : vector<8x128xf32>
    %182 = arith.divf %180, %181 : vector<8x128xf32>
    %183 = vector.extract_strided_slice %165 {offsets = [0, 256], sizes = [8, 128], strides = [1, 1]} : vector<8x384xf32> to vector<8x128xf32>
    %184 = vector.extract_strided_slice %166 {offsets = [0, 256], sizes = [8, 128], strides = [1, 1]} : vector<8x384xf32> to vector<8x128xf32>
    %185 = vector.broadcast %4 : vector<1x128xf32> to vector<8x128xf32>
    %186 = arith.addf %184, %185 : vector<8x128xf32>
    %187 = arith.mulf %174, %186 : vector<8x128xf32>
    %188 = arith.addf %183, %187 : vector<8x128xf32>
    %189 = math.tanh %188 : vector<8x128xf32>
    %cst_47 = arith.constant 1.000000e+00 : f32
    %190 = vector.broadcast %cst_47 : f32 to vector<8x128xf32>
    %191 = arith.subf %190, %182 : vector<8x128xf32>
    %192 = arith.mulf %191, %189 : vector<8x128xf32>
    %193 = arith.mulf %182, %158 : vector<8x128xf32>
    %194 = arith.addf %192, %193 : vector<8x128xf32>
    %195 = arith.addi %5, %c4_i32 : i32
    %c8_i32_48 = arith.constant 8 : i32
    %196 = arith.cmpi slt, %195, %c8_i32_48 : i32
    %197 = arith.select %196, %194, %158 : vector<8x128xf32>
    %198 = arith.index_cast %c4_i32 : i32 to index
    %c0_49 = arith.constant 0 : index
    %c0_50 = arith.constant 0 : index
    %199 = vector.load %arg4[%198, %c0_49, %c0_50] : memref<8x8x128xf32, #tpu.memory_space<vmem>>, vector<1x8x128xf32>
    %200 = vector.shape_cast %199 : vector<1x8x128xf32> to vector<8x128xf32>
    %201 = vector.shape_cast %197 : vector<8x128xf32> to vector<1x8x128xf32>
    tpu.vector_store %arg4[%198, %c0_49, %c0_50], %201 {strides = array<i32>} : memref<8x8x128xf32, #tpu.memory_space<vmem>>, vector<1x8x128xf32>,
    %c5_i32 = arith.constant 5 : i32
    %202 = arith.index_cast %c5_i32 : i32 to index
    %c0_51 = arith.constant 0 : index
    %c0_52 = arith.constant 0 : index
    %203 = vector.load %arg1[%202, %c0_51, %c0_52] : memref<8x8x384xf32, #tpu.memory_space<vmem>>, vector<1x8x384xf32>
    %204 = vector.shape_cast %203 : vector<1x8x384xf32> to vector<8x384xf32>
    %cst_53 = arith.constant dense<0.000000e+00> : vector<8x384xf32>
    %205 = tpu.matmul %197, %3, %cst_53 {dimension_numbers = #tpu.dot_dimension_numbers<[1], [0], [0], [1], [0, 0, 1, 1], [], []>} : vector<8x128xf32>, vector<128x384xf32>, vector<8x384xf32> -> vector<8x384xf32>
    %206 = vector.extract_strided_slice %204 {offsets = [0, 0], sizes = [8, 128], strides = [1, 1]} : vector<8x384xf32> to vector<8x128xf32>
    %207 = vector.extract_strided_slice %205 {offsets = [0, 0], sizes = [8, 128], strides = [1, 1]} : vector<8x384xf32> to vector<8x128xf32>
    %208 = arith.addf %206, %207 : vector<8x128xf32>
    %209 = arith.negf %208 : vector<8x128xf32>
    %210 = math.exp %209 : vector<8x128xf32>
    %cst_54 = arith.constant 1.000000e+00 : f32
    %211 = vector.broadcast %cst_54 : f32 to vector<8x128xf32>
    %212 = arith.addf %211, %210 : vector<8x128xf32>
    %213 = arith.divf %211, %212 : vector<8x128xf32>
    %214 = vector.extract_strided_slice %204 {offsets = [0, 128], sizes = [8, 128], strides = [1, 1]} : vector<8x384xf32> to vector<8x128xf32>
    %215 = vector.extract_strided_slice %205 {offsets = [0, 128], sizes = [8, 128], strides = [1, 1]} : vector<8x384xf32> to vector<8x128xf32>
    %216 = arith.addf %214, %215 : vector<8x128xf32>
    %217 = arith.negf %216 : vector<8x128xf32>
    %218 = math.exp %217 : vector<8x128xf32>
    %cst_55 = arith.constant 1.000000e+00 : f32
    %219 = vector.broadcast %cst_55 : f32 to vector<8x128xf32>
    %220 = arith.addf %219, %218 : vector<8x128xf32>
    %221 = arith.divf %219, %220 : vector<8x128xf32>
    %222 = vector.extract_strided_slice %204 {offsets = [0, 256], sizes = [8, 128], strides = [1, 1]} : vector<8x384xf32> to vector<8x128xf32>
    %223 = vector.extract_strided_slice %205 {offsets = [0, 256], sizes = [8, 128], strides = [1, 1]} : vector<8x384xf32> to vector<8x128xf32>
    %224 = vector.broadcast %4 : vector<1x128xf32> to vector<8x128xf32>
    %225 = arith.addf %223, %224 : vector<8x128xf32>
    %226 = arith.mulf %213, %225 : vector<8x128xf32>
    %227 = arith.addf %222, %226 : vector<8x128xf32>
    %228 = math.tanh %227 : vector<8x128xf32>
    %cst_56 = arith.constant 1.000000e+00 : f32
    %229 = vector.broadcast %cst_56 : f32 to vector<8x128xf32>
    %230 = arith.subf %229, %221 : vector<8x128xf32>
    %231 = arith.mulf %230, %228 : vector<8x128xf32>
    %232 = arith.mulf %221, %197 : vector<8x128xf32>
    %233 = arith.addf %231, %232 : vector<8x128xf32>
    %234 = arith.addi %5, %c5_i32 : i32
    %c8_i32_57 = arith.constant 8 : i32
    %235 = arith.cmpi slt, %234, %c8_i32_57 : i32
    %236 = arith.select %235, %233, %197 : vector<8x128xf32>
    %237 = arith.index_cast %c5_i32 : i32 to index
    %c0_58 = arith.constant 0 : index
    %c0_59 = arith.constant 0 : index
    %238 = vector.load %arg4[%237, %c0_58, %c0_59] : memref<8x8x128xf32, #tpu.memory_space<vmem>>, vector<1x8x128xf32>
    %239 = vector.shape_cast %238 : vector<1x8x128xf32> to vector<8x128xf32>
    %240 = vector.shape_cast %236 : vector<8x128xf32> to vector<1x8x128xf32>
    tpu.vector_store %arg4[%237, %c0_58, %c0_59], %240 {strides = array<i32>} : memref<8x8x128xf32, #tpu.memory_space<vmem>>, vector<1x8x128xf32>,
    %c6_i32 = arith.constant 6 : i32
    %241 = arith.index_cast %c6_i32 : i32 to index
    %c0_60 = arith.constant 0 : index
    %c0_61 = arith.constant 0 : index
    %242 = vector.load %arg1[%241, %c0_60, %c0_61] : memref<8x8x384xf32, #tpu.memory_space<vmem>>, vector<1x8x384xf32>
    %243 = vector.shape_cast %242 : vector<1x8x384xf32> to vector<8x384xf32>
    %cst_62 = arith.constant dense<0.000000e+00> : vector<8x384xf32>
    %244 = tpu.matmul %236, %3, %cst_62 {dimension_numbers = #tpu.dot_dimension_numbers<[1], [0], [0], [1], [0, 0, 1, 1], [], []>} : vector<8x128xf32>, vector<128x384xf32>, vector<8x384xf32> -> vector<8x384xf32>
    %245 = vector.extract_strided_slice %243 {offsets = [0, 0], sizes = [8, 128], strides = [1, 1]} : vector<8x384xf32> to vector<8x128xf32>
    %246 = vector.extract_strided_slice %244 {offsets = [0, 0], sizes = [8, 128], strides = [1, 1]} : vector<8x384xf32> to vector<8x128xf32>
    %247 = arith.addf %245, %246 : vector<8x128xf32>
    %248 = arith.negf %247 : vector<8x128xf32>
    %249 = math.exp %248 : vector<8x128xf32>
    %cst_63 = arith.constant 1.000000e+00 : f32
    %250 = vector.broadcast %cst_63 : f32 to vector<8x128xf32>
    %251 = arith.addf %250, %249 : vector<8x128xf32>
    %252 = arith.divf %250, %251 : vector<8x128xf32>
    %253 = vector.extract_strided_slice %243 {offsets = [0, 128], sizes = [8, 128], strides = [1, 1]} : vector<8x384xf32> to vector<8x128xf32>
    %254 = vector.extract_strided_slice %244 {offsets = [0, 128], sizes = [8, 128], strides = [1, 1]} : vector<8x384xf32> to vector<8x128xf32>
    %255 = arith.addf %253, %254 : vector<8x128xf32>
    %256 = arith.negf %255 : vector<8x128xf32>
    %257 = math.exp %256 : vector<8x128xf32>
    %cst_64 = arith.constant 1.000000e+00 : f32
    %258 = vector.broadcast %cst_64 : f32 to vector<8x128xf32>
    %259 = arith.addf %258, %257 : vector<8x128xf32>
    %260 = arith.divf %258, %259 : vector<8x128xf32>
    %261 = vector.extract_strided_slice %243 {offsets = [0, 256], sizes = [8, 128], strides = [1, 1]} : vector<8x384xf32> to vector<8x128xf32>
    %262 = vector.extract_strided_slice %244 {offsets = [0, 256], sizes = [8, 128], strides = [1, 1]} : vector<8x384xf32> to vector<8x128xf32>
    %263 = vector.broadcast %4 : vector<1x128xf32> to vector<8x128xf32>
    %264 = arith.addf %262, %263 : vector<8x128xf32>
    %265 = arith.mulf %252, %264 : vector<8x128xf32>
    %266 = arith.addf %261, %265 : vector<8x128xf32>
    %267 = math.tanh %266 : vector<8x128xf32>
    %cst_65 = arith.constant 1.000000e+00 : f32
    %268 = vector.broadcast %cst_65 : f32 to vector<8x128xf32>
    %269 = arith.subf %268, %260 : vector<8x128xf32>
    %270 = arith.mulf %269, %267 : vector<8x128xf32>
    %271 = arith.mulf %260, %236 : vector<8x128xf32>
    %272 = arith.addf %270, %271 : vector<8x128xf32>
    %273 = arith.addi %5, %c6_i32 : i32
    %c8_i32_66 = arith.constant 8 : i32
    %274 = arith.cmpi slt, %273, %c8_i32_66 : i32
    %275 = arith.select %274, %272, %236 : vector<8x128xf32>
    %276 = arith.index_cast %c6_i32 : i32 to index
    %c0_67 = arith.constant 0 : index
    %c0_68 = arith.constant 0 : index
    %277 = vector.load %arg4[%276, %c0_67, %c0_68] : memref<8x8x128xf32, #tpu.memory_space<vmem>>, vector<1x8x128xf32>
    %278 = vector.shape_cast %277 : vector<1x8x128xf32> to vector<8x128xf32>
    %279 = vector.shape_cast %275 : vector<8x128xf32> to vector<1x8x128xf32>
    tpu.vector_store %arg4[%276, %c0_67, %c0_68], %279 {strides = array<i32>} : memref<8x8x128xf32, #tpu.memory_space<vmem>>, vector<1x8x128xf32>,
    %c7_i32 = arith.constant 7 : i32
    %280 = arith.index_cast %c7_i32 : i32 to index
    %c0_69 = arith.constant 0 : index
    %c0_70 = arith.constant 0 : index
    %281 = vector.load %arg1[%280, %c0_69, %c0_70] : memref<8x8x384xf32, #tpu.memory_space<vmem>>, vector<1x8x384xf32>
    %282 = vector.shape_cast %281 : vector<1x8x384xf32> to vector<8x384xf32>
    %cst_71 = arith.constant dense<0.000000e+00> : vector<8x384xf32>
    %283 = tpu.matmul %275, %3, %cst_71 {dimension_numbers = #tpu.dot_dimension_numbers<[1], [0], [0], [1], [0, 0, 1, 1], [], []>} : vector<8x128xf32>, vector<128x384xf32>, vector<8x384xf32> -> vector<8x384xf32>
    %284 = vector.extract_strided_slice %282 {offsets = [0, 0], sizes = [8, 128], strides = [1, 1]} : vector<8x384xf32> to vector<8x128xf32>
    %285 = vector.extract_strided_slice %283 {offsets = [0, 0], sizes = [8, 128], strides = [1, 1]} : vector<8x384xf32> to vector<8x128xf32>
    %286 = arith.addf %284, %285 : vector<8x128xf32>
    %287 = arith.negf %286 : vector<8x128xf32>
    %288 = math.exp %287 : vector<8x128xf32>
    %cst_72 = arith.constant 1.000000e+00 : f32
    %289 = vector.broadcast %cst_72 : f32 to vector<8x128xf32>
    %290 = arith.addf %289, %288 : vector<8x128xf32>
    %291 = arith.divf %289, %290 : vector<8x128xf32>
    %292 = vector.extract_strided_slice %282 {offsets = [0, 128], sizes = [8, 128], strides = [1, 1]} : vector<8x384xf32> to vector<8x128xf32>
    %293 = vector.extract_strided_slice %283 {offsets = [0, 128], sizes = [8, 128], strides = [1, 1]} : vector<8x384xf32> to vector<8x128xf32>
    %294 = arith.addf %292, %293 : vector<8x128xf32>
    %295 = arith.negf %294 : vector<8x128xf32>
    %296 = math.exp %295 : vector<8x128xf32>
    %cst_73 = arith.constant 1.000000e+00 : f32
    %297 = vector.broadcast %cst_73 : f32 to vector<8x128xf32>
    %298 = arith.addf %297, %296 : vector<8x128xf32>
    %299 = arith.divf %297, %298 : vector<8x128xf32>
    %300 = vector.extract_strided_slice %282 {offsets = [0, 256], sizes = [8, 128], strides = [1, 1]} : vector<8x384xf32> to vector<8x128xf32>
    %301 = vector.extract_strided_slice %283 {offsets = [0, 256], sizes = [8, 128], strides = [1, 1]} : vector<8x384xf32> to vector<8x128xf32>
    %302 = vector.broadcast %4 : vector<1x128xf32> to vector<8x128xf32>
    %303 = arith.addf %301, %302 : vector<8x128xf32>
    %304 = arith.mulf %291, %303 : vector<8x128xf32>
    %305 = arith.addf %300, %304 : vector<8x128xf32>
    %306 = math.tanh %305 : vector<8x128xf32>
    %cst_74 = arith.constant 1.000000e+00 : f32
    %307 = vector.broadcast %cst_74 : f32 to vector<8x128xf32>
    %308 = arith.subf %307, %299 : vector<8x128xf32>
    %309 = arith.mulf %308, %306 : vector<8x128xf32>
    %310 = arith.mulf %299, %275 : vector<8x128xf32>
    %311 = arith.addf %309, %310 : vector<8x128xf32>
    %312 = arith.addi %5, %c7_i32 : i32
    %c8_i32_75 = arith.constant 8 : i32
    %313 = arith.cmpi slt, %312, %c8_i32_75 : i32
    %314 = arith.select %313, %311, %275 : vector<8x128xf32>
    %315 = arith.index_cast %c7_i32 : i32 to index
    %c0_76 = arith.constant 0 : index
    %c0_77 = arith.constant 0 : index
    %316 = vector.load %arg4[%315, %c0_76, %c0_77] : memref<8x8x128xf32, #tpu.memory_space<vmem>>, vector<1x8x128xf32>
    %317 = vector.shape_cast %316 : vector<1x8x128xf32> to vector<8x128xf32>
    %318 = vector.shape_cast %314 : vector<8x128xf32> to vector<1x8x128xf32>
    tpu.vector_store %arg4[%315, %c0_76, %c0_77], %318 {strides = array<i32>} : memref<8x8x128xf32, #tpu.memory_space<vmem>>, vector<1x8x128xf32>,
    %c8_i32_78 = arith.constant 8 : i32
    %c0_79 = arith.constant 0 : index
    %c0_80 = arith.constant 0 : index
    %319 = vector.load %arg6[%c0_79, %c0_80] : memref<8x128xf32, #tpu.memory_space<vmem>>, vector<8x128xf32>
    tpu.vector_store %arg6[%c0_79, %c0_80], %314 {strides = array<i32>} : memref<8x128xf32, #tpu.memory_space<vmem>>, vector<8x128xf32>,
    %c0_i32_81 = arith.constant 0 : i32
    %320 = arith.cmpi eq, %arg0, %c0_i32_81 : i32
    %321 = arith.extui %320 : i1 to i32
    %c0_i32_82 = arith.constant 0 : i32
    %322 = arith.cmpi ne, %321, %c0_i32_82 : i32
    scf.if %322 {
      %c0_83 = arith.constant 0 : index
      %c0_84 = arith.constant 0 : index
      %323 = vector.load %arg5[%c0_83, %c0_84] : memref<8x128xf32, #tpu.memory_space<vmem>>, vector<8x128xf32>
      tpu.vector_store %arg5[%c0_83, %c0_84], %314 {strides = array<i32>} : memref<8x128xf32, #tpu.memory_space<vmem>>, vector<8x128xf32>,
    } else {
    }
    return
  }
  func.func @transform_0(%arg0: i32) -> (i32, i32, i32) {
    %c0_i32 = arith.constant 0 : i32
    %c0_i32_0 = arith.constant 0 : i32
    %c0_i32_1 = arith.constant 0 : i32
    return %arg0, %c0_i32, %c0_i32_0 : i32, i32, i32
  }
  func.func @transform_1(%arg0: i32) -> (i32, i32) {
    %c0_i32 = arith.constant 0 : i32
    %c0_i32_0 = arith.constant 0 : i32
    %c0_i32_1 = arith.constant 0 : i32
    return %c0_i32, %c0_i32_0 : i32, i32
  }
  func.func @transform_2(%arg0: i32) -> (i32, i32) {
    %c0_i32 = arith.constant 0 : i32
    %c0_i32_0 = arith.constant 0 : i32
    %c0_i32_1 = arith.constant 0 : i32
    return %c0_i32, %c0_i32_0 : i32, i32
  }
  func.func @transform_3(%arg0: i32) -> (i32, i32, i32) {
    %c0_i32 = arith.constant 0 : i32
    %c0_i32_0 = arith.constant 0 : i32
    %c0_i32_1 = arith.constant 0 : i32
    return %arg0, %c0_i32, %c0_i32_0 : i32, i32, i32
  }
  func.func @transform_4(%arg0: i32) -> (i32, i32) {
    %c0_i32 = arith.constant 0 : i32
    %c0_i32_0 = arith.constant 0 : i32
    %c0_i32_1 = arith.constant 0 : i32
    return %c0_i32, %c0_i32_0 : i32, i32
  }
}

</mosaic_0001>

<llo_original>
// kernel: tpu_custom_call.1
$region0: #{tpu_custom_call.1}
  #allocation0 [shape = 'u32[]', space=smem, size = 0x4, offset = 0x4, fixed_abs, tag = 'smem constant byte address 0x4 - core index']
  #allocation1 [shape = 'u32[144,128]{1,0:T(1,128)}', space=vmem, size = 0x12000, scoped, tag = 'internal scratch']
  #allocation2 [shape = 'f32[8,128]{1,0:T(8,128)}', space=vmem, size = 0x1000, scoped, tag = 'scratch operand']
  %s0 = inlined_call_operand.hbm [shape: f32[8,8,384], index: 0, kind: input, shape index: {}]
  %s1 = inlined_call_operand.hbm [shape: f32[128,384], index: 1, kind: input, shape index: {}]
  %s2 = inlined_call_operand.vmem [shape: f32[1,128], index: 2, kind: input, shape index: {}]
  %s3 = inlined_call_operand.hbm [shape: f32[8,8,128], index: 3, kind: output, shape index: {0}]
  %s4 = inlined_call_operand.hbm [shape: f32[8,128], index: 4, kind: output, shape index: {1}]
  %5 = xla_tuple %s3, %s4
  %s6 = sld [smem:[#allocation0]]
  $region46: #{tpu_custom_call.1} parent=0
    _
  %s8 = ssub.s32 1, %s6
  %s9 = scalar_select 0, %s8, %s6
  $region1: #{tpu_custom_call.1} parent=0
    #allocation3 [shape = 'u8[98304]{0}', space=vmem, size = 0x18000, scoped, tag = 'input window, operand 0, single buffered']
    #allocation4 [shape = 's32[1]{0}', space=sflag, size = 0x4, scoped, tag = 'scoped memory for tpu_custom_call.1']
    #allocation5 [shape = 's32[1]{0}', space=sflag, size = 0x4, scoped, tag = 'scoped memory for tpu_custom_call.1']
    #allocation6 [shape = 'u8[196608]{0}', space=vmem, size = 0x30000, scoped, tag = 'input window, operand 1, single buffered']
    #allocation7 [shape = 's32[1]{0}', space=sflag, size = 0x4, scoped, tag = 'scoped memory for tpu_custom_call.1']
    #allocation8 [shape = 'u8[32768]{0}', space=vmem, size = 0x8000, scoped, tag = 'output window, operand 0, single buffered']
    #allocation9 [shape = 'u8[4096]{0}', space=vmem, size = 0x1000, scoped, tag = 'output window, operand 1, single buffered']
    #allocation10 [shape = 's32[1]{0}', space=sflag, size = 0x4, scoped, tag = 'scoped memory for tpu_custom_call.1']
    %10 = vsyncpa [#allocation4], 0
    %11 = vsyncpa [#allocation7], 0
    %12 = vsyncpa [#allocation5], 0
    %13 = vsyncpa [#allocation10], 0
    // Predicated region
    $region2: #{tpu_custom_call.1} parent=1 // pred_check
      _
    $region3: #{tpu_custom_call.1} parent=1 // pred_check_branch
      %15 = sbr.rel (0) target = $region5
    $region4: #{tpu_custom_call.1} parent=1 // pred_region
      %s17 = ssub.s32 3072, 3072
      %18 = vsyncadd [#allocation4], %s17
      %s19 = sshll.u32 [#allocation3], 4
      %s20 = int_to_ptr.vmem [resolvable:$true] %s19
      %25 = dma.hbm_to_vmem [thread:$0]  %s0, 3072, %s20, [#allocation4], 384, 384, 24
    $region5: #{tpu_custom_call.1} parent=1 // pred_fallthru
      _
    // Predicated region
    $region6: #{tpu_custom_call.1} parent=1 // pred_check
      _
    $region7: #{tpu_custom_call.1} parent=1 // pred_check_branch
      %27 = sbr.rel (0) target = $region9
    $region8: #{tpu_custom_call.1} parent=1 // pred_region
      %s29 = ssub.s32 6144, 6144
      %30 = vsyncadd [#allocation7], %s29
      %s31 = sshll.u32 [#allocation6], 4
      %s32 = int_to_ptr.vmem [resolvable:$true] %s31
      %37 = dma.hbm_to_vmem [thread:$0]  %s1, 6144, %s32, [#allocation7], 384, 384, 24
    $region9: #{tpu_custom_call.1} parent=1 // pred_fallthru
      _
    // Predicated region
    $region10: #{tpu_custom_call.1} parent=1 // pred_check
      _
    $region11: #{tpu_custom_call.1} parent=1 // pred_check_branch
      %39 = sbr.rel (0) target = $region13
    $region12: #{tpu_custom_call.1} parent=1 // pred_region
      _
    $region13: #{tpu_custom_call.1} parent=1 // pred_fallthru
      _
    // Predicated region
    $region14: #{tpu_custom_call.1} parent=1 // pred_check
      _
    $region15: #{tpu_custom_call.1} parent=1 // pred_check_branch
      %41 = sbr.rel (0) target = $region17
    $region16: #{tpu_custom_call.1} parent=1 // pred_region
      %42 = dma.done [#allocation4], 3072
    $region17: #{tpu_custom_call.1} parent=1 // pred_fallthru
      _
    // Predicated region
    $region18: #{tpu_custom_call.1} parent=1 // pred_check
      _
    $region19: #{tpu_custom_call.1} parent=1 // pred_check_branch
      %44 = sbr.rel (0) target = $region21
    $region20: #{tpu_custom_call.1} parent=1 // pred_region
      %45 = dma.done [#allocation7], 6144
    $region21: #{tpu_custom_call.1} parent=1 // pred_fallthru
      _
    %p46 = scmp.eq.s32.totalorder 0, 0
    // Predicated region
    $region22: #{tpu_custom_call.1} parent=1 // pred_check
      %p47 = pneg %p46
    $region23: #{tpu_custom_call.1} parent=1 // pred_check_branch
      %49 = sbr.rel (%p47) target = $region25
    $region24: #{tpu_custom_call.1} parent=1 // pred_region
      %50 = vst [vmem:[#allocation2] sm:$0xff] 0.0
    $region25: #{tpu_custom_call.1} parent=1 // pred_fallthru
      _
    %v51 = vld [vmem:[#allocation6] sm:$0xff]
    %v52 = vld [vmem:[#allocation6 + $0x8] sm:$0xff]
    %v53 = vld [vmem:[#allocation6 + $0x10] sm:$0xff]
    %v54 = vld [vmem:[#allocation6 + $0x18] sm:$0xff]
    %v55 = vld [vmem:[#allocation6 + $0x20] sm:$0xff]
    %v56 = vld [vmem:[#allocation6 + $0x28] sm:$0xff]
    %v57 = vld [vmem:[#allocation6 + $0x30] sm:$0xff]
    %v58 = vld [vmem:[#allocation6 + $0x38] sm:$0xff]
    %v59 = vld [vmem:[#allocation6 + $0x40] sm:$0xff]
    %v60 = vld [vmem:[#allocation6 + $0x48] sm:$0xff]
    %v61 = vld [vmem:[#allocation6 + $0x50] sm:$0xff]
    %v62 = vld [vmem:[#allocation6 + $0x58] sm:$0xff]
    %v63 = vld [vmem:[#allocation6 + $0x60] sm:$0xff]
    %v64 = vld [vmem:[#allocation6 + $0x68] sm:$0xff]
    %v65 = vld [vmem:[#allocation6 + $0x70] sm:$0xff]
    %v66 = vld [vmem:[#allocation6 + $0x78] sm:$0xff]
    %v67 = vld [vmem:[#allocation6 + $0x80] sm:$0xff]
    %v68 = vld [vmem:[#allocation6 + $0x88] sm:$0xff]
    %v69 = vld [vmem:[#allocation6 + $0x90] sm:$0xff]
    %v70 = vld [vmem:[#allocation6 + $0x98] sm:$0xff]
    %v71 = vld [vmem:[#allocation6 + $0xa0] sm:$0xff]
    %v72 = vld [vmem:[#allocation6 + $0xa8] sm:$0xff]
    %v73 = vld [vmem:[#allocation6 + $0xb0] sm:$0xff]
    %v74 = vld [vmem:[#allocation6 + $0xb8] sm:$0xff]
    %v75 = vld [vmem:[#allocation6 + $0xc0] sm:$0xff]
    %v76 = vld [vmem:[#allocation6 + $0xc8] sm:$0xff]
    %v77 = vld [vmem:[#allocation6 + $0xd0] sm:$0xff]
    %v78 = vld [vmem:[#allocation6 + $0xd8] sm:$0xff]
    %v79 = vld [vmem:[#allocation6 + $0xe0] sm:$0xff]
    %v80 = vld [vmem:[#allocation6 + $0xe8] sm:$0xff]
    %v81 = vld [vmem:[#allocation6 + $0xf0] sm:$0xff]
    %v82 = vld [vmem:[#allocation6 + $0xf8] sm:$0xff]
    %v83 = vld [vmem:[#allocation6 + $0x100] sm:$0xff]
    %v84 = vld [vmem:[#allocation6 + $0x108] sm:$0xff]
    %v85 = vld [vmem:[#allocation6 + $0x110] sm:$0xff]
    %v86 = vld [vmem:[#allocation6 + $0x118] sm:$0xff]
    %v87 = vld [vmem:[#allocation6 + $0x120] sm:$0xff]
    %v88 = vld [vmem:[#allocation6 + $0x128] sm:$0xff]
    %v89 = vld [vmem:[#allocation6 + $0x130] sm:$0xff]
    %v90 = vld [vmem:[#allocation6 + $0x138] sm:$0xff]
    %v91 = vld [vmem:[#allocation6 + $0x140] sm:$0xff]
    %v92 = vld [vmem:[#allocation6 + $0x148] sm:$0xff]
    %v93 = vld [vmem:[#allocation6 + $0x150] sm:$0xff]
    %v94 = vld [vmem:[#allocation6 + $0x158] sm:$0xff]
    %v95 = vld [vmem:[#allocation6 + $0x160] sm:$0xff]
    %v96 = vld [vmem:[#allocation6 + $0x168] sm:$0xff]
    %v97 = vld [vmem:[#allocation6 + $0x170] sm:$0xff]
    %v98 = vld [vmem:[#allocation6 + $0x178] sm:$0xff]
    %v99 = vld [vmem:[%s2] sm:$0x1]
    %s100 = smul.u32 0, 8
    %v101 = vld [vmem:[#allocation2] sm:$0xff]
    %v102 = vld [vmem:[#allocation3] sm:$0xff]
    %v103 = vld [vmem:[#allocation3 + $0x8] sm:$0xff]
    %v104 = vld [vmem:[#allocation3 + $0x10] sm:$0xff]
    %105 = vmatprep.subr.mxu0 %v52
    %106 = vmatpush1.msra.mxu0 %v51
    %107 = vmatprep.subr.mxu0 %v55
    %108 = vmatpush1.msra.mxu0 %v54
    %109 = vmatprep.subr.mxu0 %v58
    %110 = vmatpush1.msra.mxu0 %v57
    %111 = vmatprep.subr.mxu0 %v61
    %112 = vmatpush1.msra.mxu0 %v60
    %113 = vmatprep.subr.mxu0 %v64
    %114 = vmatpush1.msra.mxu0 %v63
    %115 = vmatprep.subr.mxu0 %v67
    %116 = vmatpush1.msra.mxu0 %v66
    %117 = vmatprep.subr.mxu0 %v70
    %118 = vmatpush1.msra.mxu0 %v69
    %119 = vmatprep.subr.mxu0 %v73
    %120 = vmatpush1.msra.mxu0 %v72
    %121 = vmatprep.subr.mxu0 %v76
    %122 = vmatpush1.msra.mxu0 %v75
    %123 = vmatprep.subr.mxu0 %v79
    %124 = vmatpush1.msra.mxu0 %v78
    %125 = vmatprep.subr.mxu0 %v82
    %126 = vmatpush1.msra.mxu0 %v81
    %127 = vmatprep.subr.mxu0 %v85
    %128 = vmatpush1.msra.mxu0 %v84
    %129 = vmatprep.subr.mxu0 %v88
    %130 = vmatpush1.msra.mxu0 %v87
    %131 = vmatprep.subr.mxu0 %v91
    %132 = vmatpush1.msra.mxu0 %v90
    %133 = vmatprep.subr.mxu0 %v94
    %134 = vmatpush1.msra.mxu0 %v93
    %135 = vmatprep.subr.mxu0 %v97
    %136 = vmatpush1.msra.mxu0 %v96
    %137 = vmatprep.subr.mxu0 0.0
    %138 = vmatpush1.msra.mxu0 0.0
    %139 = vmatprep.subr.mxu0 0.0
    %140 = vmatpush1.msra.mxu0 0.0
    %141 = vmatprep.subr.mxu0 0.0
    %142 = vmatpush1.msra.mxu0 0.0
    %143 = vmatprep.subr.mxu0 0.0
    %144 = vmatpush1.msra.mxu0 0.0
    %145 = vmatprep.subr.mxu0 0.0
    %146 = vmatpush1.msra.mxu0 0.0
    %147 = vmatprep.subr.mxu0 0.0
    %148 = vmatpush1.msra.mxu0 0.0
    %149 = vmatprep.subr.mxu0 0.0
    %150 = vmatpush1.msra.mxu0 0.0
    %151 = vmatprep.subr.mxu0 0.0
    %152 = vmatpush1.msra.mxu0 0.0
    %153 = vmatprep.subr.mxu0 0.0
    %154 = vmatpush1.msra.mxu0 0.0
    %155 = vmatprep.subr.mxu0 0.0
    %156 = vmatpush1.msra.mxu0 0.0
    %157 = vmatprep.subr.mxu0 0.0
    %158 = vmatpush1.msra.mxu0 0.0
    %159 = vmatprep.subr.mxu0 0.0
    %160 = vmatpush1.msra.mxu0 0.0
    %161 = vmatprep.subr.mxu0 0.0
    %162 = vmatpush1.msra.mxu0 0.0
    %163 = vmatprep.subr.mxu0 0.0
    %164 = vmatpush1.msra.mxu0 0.0
    %165 = vmatprep.subr.mxu0 0.0
    %166 = vmatpush1.msra.mxu0 0.0
    %167 = vmatprep.subr.mxu0 0.0
    %168 = vmatpush1.msra.mxu0 0.0
    %169 = vmatprep.mubr.f32.mxu0 0.0
    %170 = vmatmul.mubr.f32.gmra.mrb[0].mxu0 %v101
    %v171 = vpop.f32.mrb[0].mxu0
    %v172 = vadd.f32 0.0, %v171
    %v173 = vpop.f32.mrb[0].mxu0
    %v174 = vadd.f32 0.0, %v173
    %175 = vdwg.mxu0
    %176 = vmatprep.subr.mxu0 0.0
    %177 = vmatpush1.msra.mxu0 %v53
    %178 = vmatprep.subr.mxu0 0.0
    %179 = vmatpush1.msra.mxu0 %v56
    %180 = vmatprep.subr.mxu0 0.0
    %181 = vmatpush1.msra.mxu0 %v59
    %182 = vmatprep.subr.mxu0 0.0
    %183 = vmatpush1.msra.mxu0 %v62
    %184 = vmatprep.subr.mxu0 0.0
    %185 = vmatpush1.msra.mxu0 %v65
    %186 = vmatprep.subr.mxu0 0.0
    %187 = vmatpush1.msra.mxu0 %v68
    %188 = vmatprep.subr.mxu0 0.0
    %189 = vmatpush1.msra.mxu0 %v71
    %190 = vmatprep.subr.mxu0 0.0
    %191 = vmatpush1.msra.mxu0 %v74
    %192 = vmatprep.subr.mxu0 0.0
    %193 = vmatpush1.msra.mxu0 %v77
    %194 = vmatprep.subr.mxu0 0.0
    %195 = vmatpush1.msra.mxu0 %v80
    %196 = vmatprep.subr.mxu0 0.0
    %197 = vmatpush1.msra.mxu0 %v83
    %198 = vmatprep.subr.mxu0 0.0
    %199 = vmatpush1.msra.mxu0 %v86
    %200 = vmatprep.subr.mxu0 0.0
    %201 = vmatpush1.msra.mxu0 %v89
    %202 = vmatprep.subr.mxu0 0.0
    %203 = vmatpush1.msra.mxu0 %v92
    %204 = vmatprep.subr.mxu0 0.0
    %205 = vmatpush1.msra.mxu0 %v95
    %206 = vmatprep.subr.mxu0 0.0
    %207 = vmatpush1.msra.mxu0 %v98
    %208 = vmatprep.subr.mxu0 0.0
    %209 = vmatpush1.msra.mxu0 0.0
    %210 = vmatprep.subr.mxu0 0.0
    %211 = vmatpush1.msra.mxu0 0.0
    %212 = vmatprep.subr.mxu0 0.0
    %213 = vmatpush1.msra.mxu0 0.0
    %214 = vmatprep.subr.mxu0 0.0
    %215 = vmatpush1.msra.mxu0 0.0
    %216 = vmatprep.subr.mxu0 0.0
    %217 = vmatpush1.msra.mxu0 0.0
    %218 = vmatprep.subr.mxu0 0.0
    %219 = vmatpush1.msra.mxu0 0.0
    %220 = vmatprep.subr.mxu0 0.0
    %221 = vmatpush1.msra.mxu0 0.0
    %222 = vmatprep.subr.mxu0 0.0
    %223 = vmatpush1.msra.mxu0 0.0
    %224 = vmatprep.subr.mxu0 0.0
    %225 = vmatpush1.msra.mxu0 0.0
    %226 = vmatprep.subr.mxu0 0.0
    %227 = vmatpush1.msra.mxu0 0.0
    %228 = vmatprep.subr.mxu0 0.0
    %229 = vmatpush1.msra.mxu0 0.0
    %230 = vmatprep.subr.mxu0 0.0
    %231 = vmatpush1.msra.mxu0 0.0
    %232 = vmatprep.subr.mxu0 0.0
    %233 = vmatpush1.msra.mxu0 0.0
    %234 = vmatprep.subr.mxu0 0.0
    %235 = vmatpush1.msra.mxu0 0.0
    %236 = vmatprep.subr.mxu0 0.0
    %237 = vmatpush1.msra.mxu0 0.0
    %238 = vmatprep.subr.mxu0 0.0
    %239 = vmatpush1.msra.mxu0 0.0
    %240 = vmatprep.mubr.f32.mxu0 0.0
    %241 = vmatmul.mubr.f32.gmra.mrb[0].mxu0 %v101
    %v242 = vpop.f32.mrb[0].mxu0
    %v243 = vadd.f32 0.0, %v242
    %v244 = vpop.f32.mrb[0].mxu0
    %245 = vdwg.mxu0
    %v246 = vadd.f32 %v102, %v172
    %v247 = vxor.u32 %v246, 2147483648
    %v248 = vmul.f32 %v247, 1.442695
    %v249 = vpow.pop %v248
    %v250 = vadd.f32 %v249, 1.0
    %v251 = vrcp.pop %v250
    %v252 = vmul.f32 1.0, %v251
    %v253 = vadd.f32 %v103, %v174
    %v254 = vxor.u32 %v253, 2147483648
    %v255 = vmul.f32 %v254, 1.442695
    %v256 = vpow.pop %v255
    %v257 = vadd.f32 %v256, 1.0
    %v258 = vrcp.pop %v257
    %v259 = vmul.f32 1.0, %v258
    %v261 = vlaneseq
    %v262 = vshrl.u32 %v261, 7
    %v263 = vsub.s32 0, %v262
    %v264 = vrot.slane %v99, %v263
    %v266 = vadd.f32 %v243, %v264
    %v267 = vmul.f32 %v252, %v266
    %v268 = vadd.f32 %v104, %v267
    %v269 = vtanh.pop %v268
    %v270 = vsub.f32 1.0, %v259
    %v271 = vmul.f32 %v270, %v269
    %v272 = vmul.f32 %v259, %v101
    %v273 = vadd.f32 %v271, %v272
    %p274 = scmp.lt.s32.totalorder %s100, 8
    %s275 = scalar_select %p274, 1, 0
    %v276 = vstv %s275
    %vm277 = vcmp.eq.s32.totalorder %v276, 1
    %v278 = vsel %vm277, %v273, %v101
    %279 = vst [vmem:[#allocation8] sm:$0xff] %v278
    %s280 = scalar_lea.vmem [#allocation3], 24
    %v281 = vld [vmem:[%s280] sm:$0xff]
    %v282 = vld [vmem:[%s280 + $0x8] sm:$0xff]
    %v283 = vld [vmem:[%s280 + $0x10] sm:$0xff]
    %284 = vmatprep.subr.mxu0 %v52
    %285 = vmatpush1.msra.mxu0 %v51
    %286 = vmatprep.subr.mxu0 %v55
    %287 = vmatpush1.msra.mxu0 %v54
    %288 = vmatprep.subr.mxu0 %v58
    %289 = vmatpush1.msra.mxu0 %v57
    %290 = vmatprep.subr.mxu0 %v61
    %291 = vmatpush1.msra.mxu0 %v60
    %292 = vmatprep.subr.mxu0 %v64
    %293 = vmatpush1.msra.mxu0 %v63
    %294 = vmatprep.subr.mxu0 %v67
    %295 = vmatpush1.msra.mxu0 %v66
    %296 = vmatprep.subr.mxu0 %v70
    %297 = vmatpush1.msra.mxu0 %v69
    %298 = vmatprep.subr.mxu0 %v73
    %299 = vmatpush1.msra.mxu0 %v72
    %300 = vmatprep.subr.mxu0 %v76
    %301 = vmatpush1.msra.mxu0 %v75
    %302 = vmatprep.subr.mxu0 %v79
    %303 = vmatpush1.msra.mxu0 %v78
    %304 = vmatprep.subr.mxu0 %v82
    %305 = vmatpush1.msra.mxu0 %v81
    %306 = vmatprep.subr.mxu0 %v85
    %307 = vmatpush1.msra.mxu0 %v84
    %308 = vmatprep.subr.mxu0 %v88
    %309 = vmatpush1.msra.mxu0 %v87
    %310 = vmatprep.subr.mxu0 %v91
    %311 = vmatpush1.msra.mxu0 %v90
    %312 = vmatprep.subr.mxu0 %v94
    %313 = vmatpush1.msra.mxu0 %v93
    %314 = vmatprep.subr.mxu0 %v97
    %315 = vmatpush1.msra.mxu0 %v96
    %316 = vmatprep.subr.mxu0 0.0
    %317 = vmatpush1.msra.mxu0 0.0
    %318 = vmatprep.subr.mxu0 0.0
    %319 = vmatpush1.msra.mxu0 0.0
    %320 = vmatprep.subr.mxu0 0.0
    %321 = vmatpush1.msra.mxu0 0.0
    %322 = vmatprep.subr.mxu0 0.0
    %323 = vmatpush1.msra.mxu0 0.0
    %324 = vmatprep.subr.mxu0 0.0
    %325 = vmatpush1.msra.mxu0 0.0
    %326 = vmatprep.subr.mxu0 0.0
    %327 = vmatpush1.msra.mxu0 0.0
    %328 = vmatprep.subr.mxu0 0.0
    %329 = vmatpush1.msra.mxu0 0.0
    %330 = vmatprep.subr.mxu0 0.0
    %331 = vmatpush1.msra.mxu0 0.0
    %332 = vmatprep.subr.mxu0 0.0
    %333 = vmatpush1.msra.mxu0 0.0
    %334 = vmatprep.subr.mxu0 0.0
    %335 = vmatpush1.msra.mxu0 0.0
    %336 = vmatprep.subr.mxu0 0.0
    %337 = vmatpush1.msra.mxu0 0.0
    %338 = vmatprep.subr.mxu0 0.0
    %339 = vmatpush1.msra.mxu0 0.0
    %340 = vmatprep.subr.mxu0 0.0
    %341 = vmatpush1.msra.mxu0 0.0
    %342 = vmatprep.subr.mxu0 0.0
    %343 = vmatpush1.msra.mxu0 0.0
    %344 = vmatprep.subr.mxu0 0.0
    %345 = vmatpush1.msra.mxu0 0.0
    %346 = vmatprep.subr.mxu0 0.0
    %347 = vmatpush1.msra.mxu0 0.0
    %348 = vmatprep.mubr.f32.mxu0 0.0
    %349 = vmatmul.mubr.f32.gmra.mrb[0].mxu0 %v278
    %v350 = vpop.f32.mrb[0].mxu0
    %v351 = vadd.f32 0.0, %v350
    %v352 = vpop.f32.mrb[0].mxu0
    %v353 = vadd.f32 0.0, %v352
    %354 = vdwg.mxu0
    %355 = vmatprep.subr.mxu0 0.0
    %356 = vmatpush1.msra.mxu0 %v53
    %357 = vmatprep.subr.mxu0 0.0
    %358 = vmatpush1.msra.mxu0 %v56
    %359 = vmatprep.subr.mxu0 0.0
    %360 = vmatpush1.msra.mxu0 %v59
    %361 = vmatprep.subr.mxu0 0.0
    %362 = vmatpush1.msra.mxu0 %v62
    %363 = vmatprep.subr.mxu0 0.0
    %364 = vmatpush1.msra.mxu0 %v65
    %365 = vmatprep.subr.mxu0 0.0
    %366 = vmatpush1.msra.mxu0 %v68
    %367 = vmatprep.subr.mxu0 0.0
    %368 = vmatpush1.msra.mxu0 %v71
    %369 = vmatprep.subr.mxu0 0.0
    %370 = vmatpush1.msra.mxu0 %v74
    %371 = vmatprep.subr.mxu0 0.0
    %372 = vmatpush1.msra.mxu0 %v77
    %373 = vmatprep.subr.mxu0 0.0
    %374 = vmatpush1.msra.mxu0 %v80
    %375 = vmatprep.subr.mxu0 0.0
    %376 = vmatpush1.msra.mxu0 %v83
    %377 = vmatprep.subr.mxu0 0.0
    %378 = vmatpush1.msra.mxu0 %v86
    %379 = vmatprep.subr.mxu0 0.0
    %380 = vmatpush1.msra.mxu0 %v89
    %381 = vmatprep.subr.mxu0 0.0
    %382 = vmatpush1.msra.mxu0 %v92
    %383 = vmatprep.subr.mxu0 0.0
    %384 = vmatpush1.msra.mxu0 %v95
    %385 = vmatprep.subr.mxu0 0.0
    %386 = vmatpush1.msra.mxu0 %v98
    %387 = vmatprep.subr.mxu0 0.0
    %388 = vmatpush1.msra.mxu0 0.0
    %389 = vmatprep.subr.mxu0 0.0
    %390 = vmatpush1.msra.mxu0 0.0
    %391 = vmatprep.subr.mxu0 0.0
    %392 = vmatpush1.msra.mxu0 0.0
    %393 = vmatprep.subr.mxu0 0.0
    %394 = vmatpush1.msra.mxu0 0.0
    %395 = vmatprep.subr.mxu0 0.0
    %396 = vmatpush1.msra.mxu0 0.0
    %397 = vmatprep.subr.mxu0 0.0
    %398 = vmatpush1.msra.mxu0 0.0
    %399 = vmatprep.subr.mxu0 0.0
    %400 = vmatpush1.msra.mxu0 0.0
    %401 = vmatprep.subr.mxu0 0.0
    %402 = vmatpush1.msra.mxu0 0.0
    %403 = vmatprep.subr.mxu0 0.0
    %404 = vmatpush1.msra.mxu0 0.0
    %405 = vmatprep.subr.mxu0 0.0
    %406 = vmatpush1.msra.mxu0 0.0
    %407 = vmatprep.subr.mxu0 0.0
    %408 = vmatpush1.msra.mxu0 0.0
    %409 = vmatprep.subr.mxu0 0.0
    %410 = vmatpush1.msra.mxu0 0.0
    %411 = vmatprep.subr.mxu0 0.0
    %412 = vmatpush1.msra.mxu0 0.0
    %413 = vmatprep.subr.mxu0 0.0
    %414 = vmatpush1.msra.mxu0 0.0
    %415 = vmatprep.subr.mxu0 0.0
    %416 = vmatpush1.msra.mxu0 0.0
    %417 = vmatprep.subr.mxu0 0.0
    %418 = vmatpush1.msra.mxu0 0.0
    %419 = vmatprep.mubr.f32.mxu0 0.0
    %420 = vmatmul.mubr.f32.gmra.mrb[0].mxu0 %v278
    %v421 = vpop.f32.mrb[0].mxu0
    %v422 = vadd.f32 0.0, %v421
    %v423 = vpop.f32.mrb[0].mxu0
    %424 = vdwg.mxu0
    %v425 = vadd.f32 %v281, %v351
    %v426 = vxor.u32 %v425, 2147483648
    %v427 = vmul.f32 %v426, 1.442695
    %v428 = vpow.pop %v427
    %v429 = vadd.f32 %v428, 1.0
    %v430 = vrcp.pop %v429
    %v431 = vmul.f32 1.0, %v430
    %v432 = vadd.f32 %v282, %v353
    %v433 = vxor.u32 %v432, 2147483648
    %v434 = vmul.f32 %v433, 1.442695
    %v435 = vpow.pop %v434
    %v436 = vadd.f32 %v435, 1.0
    %v437 = vrcp.pop %v436
    %v438 = vmul.f32 1.0, %v437
    %v439 = vadd.f32 %v422, %v264
    %v440 = vmul.f32 %v431, %v439
    %v441 = vadd.f32 %v283, %v440
    %v442 = vtanh.pop %v441
    %v443 = vsub.f32 1.0, %v438
    %v444 = vmul.f32 %v443, %v442
    %v445 = vmul.f32 %v438, %v278
    %v446 = vadd.f32 %v444, %v445
    %s447 = sadd.s32 %s100, 1
    %p448 = scmp.lt.s32.totalorder %s447, 8
    %s449 = scalar_select %p448, 1, 0
    %v450 = vstv %s449
    %vm451 = vcmp.eq.s32.totalorder %v450, 1
    %v452 = vsel %vm451, %v446, %v278
    %s453 = scalar_lea.vmem [#allocation8], 8
    %454 = vst [vmem:[%s453] sm:$0xff] %v452
    %s455 = scalar_lea.vmem [#allocation3], 48
    %v456 = vld [vmem:[%s455] sm:$0xff]
    %v457 = vld [vmem:[%s455 + $0x8] sm:$0xff]
    %v458 = vld [vmem:[%s455 + $0x10] sm:$0xff]
    %459 = vmatprep.subr.mxu0 %v52
    %460 = vmatpush1.msra.mxu0 %v51
    %461 = vmatprep.subr.mxu0 %v55
    %462 = vmatpush1.msra.mxu0 %v54
    %463 = vmatprep.subr.mxu0 %v58
    %464 = vmatpush1.msra.mxu0 %v57
    %465 = vmatprep.subr.mxu0 %v61
    %466 = vmatpush1.msra.mxu0 %v60
    %467 = vmatprep.subr.mxu0 %v64
    %468 = vmatpush1.msra.mxu0 %v63
    %469 = vmatprep.subr.mxu0 %v67
    %470 = vmatpush1.msra.mxu0 %v66
    %471 = vmatprep.subr.mxu0 %v70
    %472 = vmatpush1.msra.mxu0 %v69
    %473 = vmatprep.subr.mxu0 %v73
    %474 = vmatpush1.msra.mxu0 %v72
    %475 = vmatprep.subr.mxu0 %v76
    %476 = vmatpush1.msra.mxu0 %v75
    %477 = vmatprep.subr.mxu0 %v79
    %478 = vmatpush1.msra.mxu0 %v78
    %479 = vmatprep.subr.mxu0 %v82
    %480 = vmatpush1.msra.mxu0 %v81
    %481 = vmatprep.subr.mxu0 %v85
    %482 = vmatpush1.msra.mxu0 %v84
    %483 = vmatprep.subr.mxu0 %v88
    %484 = vmatpush1.msra.mxu0 %v87
    %485 = vmatprep.subr.mxu0 %v91
    %486 = vmatpush1.msra.mxu0 %v90
    %487 = vmatprep.subr.mxu0 %v94
    %488 = vmatpush1.msra.mxu0 %v93
    %489 = vmatprep.subr.mxu0 %v97
    %490 = vmatpush1.msra.mxu0 %v96
    %491 = vmatprep.subr.mxu0 0.0
    %492 = vmatpush1.msra.mxu0 0.0
    %493 = vmatprep.subr.mxu0 0.0
    %494 = vmatpush1.msra.mxu0 0.0
    %495 = vmatprep.subr.mxu0 0.0
    %496 = vmatpush1.msra.mxu0 0.0
    %497 = vmatprep.subr.mxu0 0.0
    %498 = vmatpush1.msra.mxu0 0.0
    %499 = vmatprep.subr.mxu0 0.0
    %500 = vmatpush1.msra.mxu0 0.0
    %501 = vmatprep.subr.mxu0 0.0
    %502 = vmatpush1.msra.mxu0 0.0
    %503 = vmatprep.subr.mxu0 0.0
    %504 = vmatpush1.msra.mxu0 0.0
    %505 = vmatprep.subr.mxu0 0.0
    %506 = vmatpush1.msra.mxu0 0.0
    %507 = vmatprep.subr.mxu0 0.0
    %508 = vmatpush1.msra.mxu0 0.0
    %509 = vmatprep.subr.mxu0 0.0
    %510 = vmatpush1.msra.mxu0 0.0
    %511 = vmatprep.subr.mxu0 0.0
    %512 = vmatpush1.msra.mxu0 0.0
    %513 = vmatprep.subr.mxu0 0.0
    %514 = vmatpush1.msra.mxu0 0.0
    %515 = vmatprep.subr.mxu0 0.0
    %516 = vmatpush1.msra.mxu0 0.0
    %517 = vmatprep.subr.mxu0 0.0
    %518 = vmatpush1.msra.mxu0 0.0
    %519 = vmatprep.subr.mxu0 0.0
    %520 = vmatpush1.msra.mxu0 0.0
    %521 = vmatprep.subr.mxu0 0.0
    %522 = vmatpush1.msra.mxu0 0.0
    %523 = vmatprep.mubr.f32.mxu0 0.0
    %524 = vmatmul.mubr.f32.gmra.mrb[0].mxu0 %v452
    %v525 = vpop.f32.mrb[0].mxu0
    %v526 = vadd.f32 0.0, %v525
    %v527 = vpop.f32.mrb[0].mxu0
    %v528 = vadd.f32 0.0, %v527
    %529 = vdwg.mxu0
    %530 = vmatprep.subr.mxu0 0.0
    %531 = vmatpush1.msra.mxu0 %v53
    %532 = vmatprep.subr.mxu0 0.0
    %533 = vmatpush1.msra.mxu0 %v56
    %534 = vmatprep.subr.mxu0 0.0
    %535 = vmatpush1.msra.mxu0 %v59
    %536 = vmatprep.subr.mxu0 0.0
    %537 = vmatpush1.msra.mxu0 %v62
    %538 = vmatprep.subr.mxu0 0.0
    %539 = vmatpush1.msra.mxu0 %v65
    %540 = vmatprep.subr.mxu0 0.0
    %541 = vmatpush1.msra.mxu0 %v68
    %542 = vmatprep.subr.mxu0 0.0
    %543 = vmatpush1.msra.mxu0 %v71
    %544 = vmatprep.subr.mxu0 0.0
    %545 = vmatpush1.msra.mxu0 %v74
    %546 = vmatprep.subr.mxu0 0.0
    %547 = vmatpush1.msra.mxu0 %v77
    %548 = vmatprep.subr.mxu0 0.0
    %549 = vmatpush1.msra.mxu0 %v80
    %550 = vmatprep.subr.mxu0 0.0
    %551 = vmatpush1.msra.mxu0 %v83
    %552 = vmatprep.subr.mxu0 0.0
    %553 = vmatpush1.msra.mxu0 %v86
    %554 = vmatprep.subr.mxu0 0.0
    %555 = vmatpush1.msra.mxu0 %v89
    %556 = vmatprep.subr.mxu0 0.0
    %557 = vmatpush1.msra.mxu0 %v92
    %558 = vmatprep.subr.mxu0 0.0
    %559 = vmatpush1.msra.mxu0 %v95
    %560 = vmatprep.subr.mxu0 0.0
    %561 = vmatpush1.msra.mxu0 %v98
    %562 = vmatprep.subr.mxu0 0.0
    %563 = vmatpush1.msra.mxu0 0.0
    %564 = vmatprep.subr.mxu0 0.0
    %565 = vmatpush1.msra.mxu0 0.0
    %566 = vmatprep.subr.mxu0 0.0
    %567 = vmatpush1.msra.mxu0 0.0
    %568 = vmatprep.subr.mxu0 0.0
    %569 = vmatpush1.msra.mxu0 0.0
    %570 = vmatprep.subr.mxu0 0.0
    %571 = vmatpush1.msra.mxu0 0.0
    %572 = vmatprep.subr.mxu0 0.0
    %573 = vmatpush1.msra.mxu0 0.0
    %574 = vmatprep.subr.mxu0 0.0
    %575 = vmatpush1.msra.mxu0 0.0
    %576 = vmatprep.subr.mxu0 0.0
    %577 = vmatpush1.msra.mxu0 0.0
    %578 = vmatprep.subr.mxu0 0.0
    %579 = vmatpush1.msra.mxu0 0.0
    %580 = vmatprep.subr.mxu0 0.0
    %581 = vmatpush1.msra.mxu0 0.0
    %582 = vmatprep.subr.mxu0 0.0
    %583 = vmatpush1.msra.mxu0 0.0
    %584 = vmatprep.subr.mxu0 0.0
    %585 = vmatpush1.msra.mxu0 0.0
    %586 = vmatprep.subr.mxu0 0.0
    %587 = vmatpush1.msra.mxu0 0.0
    %588 = vmatprep.subr.mxu0 0.0
    %589 = vmatpush1.msra.mxu0 0.0
    %590 = vmatprep.subr.mxu0 0.0
    %591 = vmatpush1.msra.mxu0 0.0
    %592 = vmatprep.subr.mxu0 0.0
    %593 = vmatpush1.msra.mxu0 0.0
    %594 = vmatprep.mubr.f32.mxu0 0.0
    %595 = vmatmul.mubr.f32.gmra.mrb[0].mxu0 %v452
    %v596 = vpop.f32.mrb[0].mxu0
    %v597 = vadd.f32 0.0, %v596
    %v598 = vpop.f32.mrb[0].mxu0
    %599 = vdwg.mxu0
    %v600 = vadd.f32 %v456, %v526
    %v601 = vxor.u32 %v600, 2147483648
    %v602 = vmul.f32 %v601, 1.442695
    %v603 = vpow.pop %v602
    %v604 = vadd.f32 %v603, 1.0
    %v605 = vrcp.pop %v604
    %v606 = vmul.f32 1.0, %v605
    %v607 = vadd.f32 %v457, %v528
    %v608 = vxor.u32 %v607, 2147483648
    %v609 = vmul.f32 %v608, 1.442695
    %v610 = vpow.pop %v609
    %v611 = vadd.f32 %v610, 1.0
    %v612 = vrcp.pop %v611
    %v613 = vmul.f32 1.0, %v612
    %v614 = vadd.f32 %v597, %v264
    %v615 = vmul.f32 %v606, %v614
    %v616 = vadd.f32 %v458, %v615
    %v617 = vtanh.pop %v616
    %v618 = vsub.f32 1.0, %v613
    %v619 = vmul.f32 %v618, %v617
    %v620 = vmul.f32 %v613, %v452
    %v621 = vadd.f32 %v619, %v620
    %s622 = sadd.s32 %s100, 2
    %p623 = scmp.lt.s32.totalorder %s622, 8
    %s624 = scalar_select %p623, 1, 0
    %v625 = vstv %s624
    %vm626 = vcmp.eq.s32.totalorder %v625, 1
    %v627 = vsel %vm626, %v621, %v452
    %s628 = scalar_lea.vmem [#allocation8], 16
    %629 = vst [vmem:[%s628] sm:$0xff] %v627
    %s630 = scalar_lea.vmem [#allocation3], 72
    %v631 = vld [vmem:[%s630] sm:$0xff]
    %v632 = vld [vmem:[%s630 + $0x8] sm:$0xff]
    %v633 = vld [vmem:[%s630 + $0x10] sm:$0xff]
    %634 = vmatprep.subr.mxu0 %v52
    %635 = vmatpush1.msra.mxu0 %v51
    %636 = vmatprep.subr.mxu0 %v55
    %637 = vmatpush1.msra.mxu0 %v54
    %638 = vmatprep.subr.mxu0 %v58
    %639 = vmatpush1.msra.mxu0 %v57
    %640 = vmatprep.subr.mxu0 %v61
    %641 = vmatpush1.msra.mxu0 %v60
    %642 = vmatprep.subr.mxu0 %v64
    %643 = vmatpush1.msra.mxu0 %v63
    %644 = vmatprep.subr.mxu0 %v67
    %645 = vmatpush1.msra.mxu0 %v66
    %646 = vmatprep.subr.mxu0 %v70
    %647 = vmatpush1.msra.mxu0 %v69
    %648 = vmatprep.subr.mxu0 %v73
    %649 = vmatpush1.msra.mxu0 %v72
    %650 = vmatprep.subr.mxu0 %v76
    %651 = vmatpush1.msra.mxu0 %v75
    %652 = vmatprep.subr.mxu0 %v79
    %653 = vmatpush1.msra.mxu0 %v78
    %654 = vmatprep.subr.mxu0 %v82
    %655 = vmatpush1.msra.mxu0 %v81
    %656 = vmatprep.subr.mxu0 %v85
    %657 = vmatpush1.msra.mxu0 %v84
    %658 = vmatprep.subr.mxu0 %v88
    %659 = vmatpush1.msra.mxu0 %v87
    %660 = vmatprep.subr.mxu0 %v91
    %661 = vmatpush1.msra.mxu0 %v90
    %662 = vmatprep.subr.mxu0 %v94
    %663 = vmatpush1.msra.mxu0 %v93
    %664 = vmatprep.subr.mxu0 %v97
    %665 = vmatpush1.msra.mxu0 %v96
    %666 = vmatprep.subr.mxu0 0.0
    %667 = vmatpush1.msra.mxu0 0.0
    %668 = vmatprep.subr.mxu0 0.0
    %669 = vmatpush1.msra.mxu0 0.0
    %670 = vmatprep.subr.mxu0 0.0
    %671 = vmatpush1.msra.mxu0 0.0
    %672 = vmatprep.subr.mxu0 0.0
    %673 = vmatpush1.msra.mxu0 0.0
    %674 = vmatprep.subr.mxu0 0.0
    %675 = vmatpush1.msra.mxu0 0.0
    %676 = vmatprep.subr.mxu0 0.0
    %677 = vmatpush1.msra.mxu0 0.0
    %678 = vmatprep.subr.mxu0 0.0
    %679 = vmatpush1.msra.mxu0 0.0
    %680 = vmatprep.subr.mxu0 0.0
    %681 = vmatpush1.msra.mxu0 0.0
    %682 = vmatprep.subr.mxu0 0.0
    %683 = vmatpush1.msra.mxu0 0.0
    %684 = vmatprep.subr.mxu0 0.0
    %685 = vmatpush1.msra.mxu0 0.0
    %686 = vmatprep.subr.mxu0 0.0
    %687 = vmatpush1.msra.mxu0 0.0
    %688 = vmatprep.subr.mxu0 0.0
    %689 = vmatpush1.msra.mxu0 0.0
    %690 = vmatprep.subr.mxu0 0.0
    %691 = vmatpush1.msra.mxu0 0.0
    %692 = vmatprep.subr.mxu0 0.0
    %693 = vmatpush1.msra.mxu0 0.0
    %694 = vmatprep.subr.mxu0 0.0
    %695 = vmatpush1.msra.mxu0 0.0
    %696 = vmatprep.subr.mxu0 0.0
    %697 = vmatpush1.msra.mxu0 0.0
    %698 = vmatprep.mubr.f32.mxu0 0.0
    %699 = vmatmul.mubr.f32.gmra.mrb[0].mxu0 %v627
    %v700 = vpop.f32.mrb[0].mxu0
    %v701 = vadd.f32 0.0, %v700
    %v702 = vpop.f32.mrb[0].mxu0
    %v703 = vadd.f32 0.0, %v702
    %704 = vdwg.mxu0
    %705 = vmatprep.subr.mxu0 0.0
    %706 = vmatpush1.msra.mxu0 %v53
    %707 = vmatprep.subr.mxu0 0.0
    %708 = vmatpush1.msra.mxu0 %v56
    %709 = vmatprep.subr.mxu0 0.0
    %710 = vmatpush1.msra.mxu0 %v59
    %711 = vmatprep.subr.mxu0 0.0
    %712 = vmatpush1.msra.mxu0 %v62
    %713 = vmatprep.subr.mxu0 0.0
    %714 = vmatpush1.msra.mxu0 %v65
    %715 = vmatprep.subr.mxu0 0.0
    %716 = vmatpush1.msra.mxu0 %v68
    %717 = vmatprep.subr.mxu0 0.0
    %718 = vmatpush1.msra.mxu0 %v71
    %719 = vmatprep.subr.mxu0 0.0
    %720 = vmatpush1.msra.mxu0 %v74
    %721 = vmatprep.subr.mxu0 0.0
    %722 = vmatpush1.msra.mxu0 %v77
    %723 = vmatprep.subr.mxu0 0.0
    %724 = vmatpush1.msra.mxu0 %v80
    %725 = vmatprep.subr.mxu0 0.0
    %726 = vmatpush1.msra.mxu0 %v83
    %727 = vmatprep.subr.mxu0 0.0
    %728 = vmatpush1.msra.mxu0 %v86
    %729 = vmatprep.subr.mxu0 0.0
    %730 = vmatpush1.msra.mxu0 %v89
    %731 = vmatprep.subr.mxu0 0.0
    %732 = vmatpush1.msra.mxu0 %v92
    %733 = vmatprep.subr.mxu0 0.0
    %734 = vmatpush1.msra.mxu0 %v95
    %735 = vmatprep.subr.mxu0 0.0
    %736 = vmatpush1.msra.mxu0 %v98
    %737 = vmatprep.subr.mxu0 0.0
    %738 = vmatpush1.msra.mxu0 0.0
    %739 = vmatprep.subr.mxu0 0.0
    %740 = vmatpush1.msra.mxu0 0.0
    %741 = vmatprep.subr.mxu0 0.0
    %742 = vmatpush1.msra.mxu0 0.0
    %743 = vmatprep.subr.mxu0 0.0
    %744 = vmatpush1.msra.mxu0 0.0
    %745 = vmatprep.subr.mxu0 0.0
    %746 = vmatpush1.msra.mxu0 0.0
    %747 = vmatprep.subr.mxu0 0.0
    %748 = vmatpush1.msra.mxu0 0.0
    %749 = vmatprep.subr.mxu0 0.0
    %750 = vmatpush1.msra.mxu0 0.0
    %751 = vmatprep.subr.mxu0 0.0
    %752 = vmatpush1.msra.mxu0 0.0
    %753 = vmatprep.subr.mxu0 0.0
    %754 = vmatpush1.msra.mxu0 0.0
    %755 = vmatprep.subr.mxu0 0.0
    %756 = vmatpush1.msra.mxu0 0.0
    %757 = vmatprep.subr.mxu0 0.0
    %758 = vmatpush1.msra.mxu0 0.0
    %759 = vmatprep.subr.mxu0 0.0
    %760 = vmatpush1.msra.mxu0 0.0
    %761 = vmatprep.subr.mxu0 0.0
    %762 = vmatpush1.msra.mxu0 0.0
    %763 = vmatprep.subr.mxu0 0.0
    %764 = vmatpush1.msra.mxu0 0.0
    %765 = vmatprep.subr.mxu0 0.0
    %766 = vmatpush1.msra.mxu0 0.0
    %767 = vmatprep.subr.mxu0 0.0
    %768 = vmatpush1.msra.mxu0 0.0
    %769 = vmatprep.mubr.f32.mxu0 0.0
    %770 = vmatmul.mubr.f32.gmra.mrb[0].mxu0 %v627
    %v771 = vpop.f32.mrb[0].mxu0
    %v772 = vadd.f32 0.0, %v771
    %v773 = vpop.f32.mrb[0].mxu0
    %774 = vdwg.mxu0
    %v775 = vadd.f32 %v631, %v701
    %v776 = vxor.u32 %v775, 2147483648
    %v777 = vmul.f32 %v776, 1.442695
    %v778 = vpow.pop %v777
    %v779 = vadd.f32 %v778, 1.0
    %v780 = vrcp.pop %v779
    %v781 = vmul.f32 1.0, %v780
    %v782 = vadd.f32 %v632, %v703
    %v783 = vxor.u32 %v782, 2147483648
    %v784 = vmul.f32 %v783, 1.442695
    %v785 = vpow.pop %v784
    %v786 = vadd.f32 %v785, 1.0
    %v787 = vrcp.pop %v786
    %v788 = vmul.f32 1.0, %v787
    %v789 = vadd.f32 %v772, %v264
    %v790 = vmul.f32 %v781, %v789
    %v791 = vadd.f32 %v633, %v790
    %v792 = vtanh.pop %v791
    %v793 = vsub.f32 1.0, %v788
    %v794 = vmul.f32 %v793, %v792
    %v795 = vmul.f32 %v788, %v627
    %v796 = vadd.f32 %v794, %v795
    %s797 = sadd.s32 %s100, 3
    %p798 = scmp.lt.s32.totalorder %s797, 8
    %s799 = scalar_select %p798, 1, 0
    %v800 = vstv %s799
    %vm801 = vcmp.eq.s32.totalorder %v800, 1
    %v802 = vsel %vm801, %v796, %v627
    %s803 = scalar_lea.vmem [#allocation8], 24
    %804 = vst [vmem:[%s803] sm:$0xff] %v802
    %s805 = scalar_lea.vmem [#allocation3], 96
    %v806 = vld [vmem:[%s805] sm:$0xff]
    %v807 = vld [vmem:[%s805 + $0x8] sm:$0xff]
    %v808 = vld [vmem:[%s805 + $0x10] sm:$0xff]
    %809 = vmatprep.subr.mxu0 %v52
    %810 = vmatpush1.msra.mxu0 %v51
    %811 = vmatprep.subr.mxu0 %v55
    %812 = vmatpush1.msra.mxu0 %v54
    %813 = vmatprep.subr.mxu0 %v58
    %814 = vmatpush1.msra.mxu0 %v57
    %815 = vmatprep.subr.mxu0 %v61
    %816 = vmatpush1.msra.mxu0 %v60
    %817 = vmatprep.subr.mxu0 %v64
    %818 = vmatpush1.msra.mxu0 %v63
    %819 = vmatprep.subr.mxu0 %v67
    %820 = vmatpush1.msra.mxu0 %v66
    %821 = vmatprep.subr.mxu0 %v70
    %822 = vmatpush1.msra.mxu0 %v69
    %823 = vmatprep.subr.mxu0 %v73
    %824 = vmatpush1.msra.mxu0 %v72
    %825 = vmatprep.subr.mxu0 %v76
    %826 = vmatpush1.msra.mxu0 %v75
    %827 = vmatprep.subr.mxu0 %v79
    %828 = vmatpush1.msra.mxu0 %v78
    %829 = vmatprep.subr.mxu0 %v82
    %830 = vmatpush1.msra.mxu0 %v81
    %831 = vmatprep.subr.mxu0 %v85
    %832 = vmatpush1.msra.mxu0 %v84
    %833 = vmatprep.subr.mxu0 %v88
    %834 = vmatpush1.msra.mxu0 %v87
    %835 = vmatprep.subr.mxu0 %v91
    %836 = vmatpush1.msra.mxu0 %v90
    %837 = vmatprep.subr.mxu0 %v94
    %838 = vmatpush1.msra.mxu0 %v93
    %839 = vmatprep.subr.mxu0 %v97
    %840 = vmatpush1.msra.mxu0 %v96
    %841 = vmatprep.subr.mxu0 0.0
    %842 = vmatpush1.msra.mxu0 0.0
    %843 = vmatprep.subr.mxu0 0.0
    %844 = vmatpush1.msra.mxu0 0.0
    %845 = vmatprep.subr.mxu0 0.0
    %846 = vmatpush1.msra.mxu0 0.0
    %847 = vmatprep.subr.mxu0 0.0
    %848 = vmatpush1.msra.mxu0 0.0
    %849 = vmatprep.subr.mxu0 0.0
    %850 = vmatpush1.msra.mxu0 0.0
    %851 = vmatprep.subr.mxu0 0.0
    %852 = vmatpush1.msra.mxu0 0.0
    %853 = vmatprep.subr.mxu0 0.0
    %854 = vmatpush1.msra.mxu0 0.0
    %855 = vmatprep.subr.mxu0 0.0
    %856 = vmatpush1.msra.mxu0 0.0
    %857 = vmatprep.subr.mxu0 0.0
    %858 = vmatpush1.msra.mxu0 0.0
    %859 = vmatprep.subr.mxu0 0.0
    %860 = vmatpush1.msra.mxu0 0.0
    %861 = vmatprep.subr.mxu0 0.0
    %862 = vmatpush1.msra.mxu0 0.0
    %863 = vmatprep.subr.mxu0 0.0
    %864 = vmatpush1.msra.mxu0 0.0
    %865 = vmatprep.subr.mxu0 0.0
    %866 = vmatpush1.msra.mxu0 0.0
    %867 = vmatprep.subr.mxu0 0.0
    %868 = vmatpush1.msra.mxu0 0.0
    %869 = vmatprep.subr.mxu0 0.0
    %870 = vmatpush1.msra.mxu0 0.0
    %871 = vmatprep.subr.mxu0 0.0
    %872 = vmatpush1.msra.mxu0 0.0
    %873 = vmatprep.mubr.f32.mxu0 0.0
    %874 = vmatmul.mubr.f32.gmra.mrb[0].mxu0 %v802
    %v875 = vpop.f32.mrb[0].mxu0
    %v876 = vadd.f32 0.0, %v875
    %v877 = vpop.f32.mrb[0].mxu0
    %v878 = vadd.f32 0.0, %v877
    %879 = vdwg.mxu0
    %880 = vmatprep.subr.mxu0 0.0
    %881 = vmatpush1.msra.mxu0 %v53
    %882 = vmatprep.subr.mxu0 0.0
    %883 = vmatpush1.msra.mxu0 %v56
    %884 = vmatprep.subr.mxu0 0.0
    %885 = vmatpush1.msra.mxu0 %v59
    %886 = vmatprep.subr.mxu0 0.0
    %887 = vmatpush1.msra.mxu0 %v62
    %888 = vmatprep.subr.mxu0 0.0
    %889 = vmatpush1.msra.mxu0 %v65
    %890 = vmatprep.subr.mxu0 0.0
    %891 = vmatpush1.msra.mxu0 %v68
    %892 = vmatprep.subr.mxu0 0.0
    %893 = vmatpush1.msra.mxu0 %v71
    %894 = vmatprep.subr.mxu0 0.0
    %895 = vmatpush1.msra.mxu0 %v74
    %896 = vmatprep.subr.mxu0 0.0
    %897 = vmatpush1.msra.mxu0 %v77
    %898 = vmatprep.subr.mxu0 0.0
    %899 = vmatpush1.msra.mxu0 %v80
    %900 = vmatprep.subr.mxu0 0.0
    %901 = vmatpush1.msra.mxu0 %v83
    %902 = vmatprep.subr.mxu0 0.0
    %903 = vmatpush1.msra.mxu0 %v86
    %904 = vmatprep.subr.mxu0 0.0
    %905 = vmatpush1.msra.mxu0 %v89
    %906 = vmatprep.subr.mxu0 0.0
    %907 = vmatpush1.msra.mxu0 %v92
    %908 = vmatprep.subr.mxu0 0.0
    %909 = vmatpush1.msra.mxu0 %v95
    %910 = vmatprep.subr.mxu0 0.0
    %911 = vmatpush1.msra.mxu0 %v98
    %912 = vmatprep.subr.mxu0 0.0
    %913 = vmatpush1.msra.mxu0 0.0
    %914 = vmatprep.subr.mxu0 0.0
    %915 = vmatpush1.msra.mxu0 0.0
    %916 = vmatprep.subr.mxu0 0.0
    %917 = vmatpush1.msra.mxu0 0.0
    %918 = vmatprep.subr.mxu0 0.0
    %919 = vmatpush1.msra.mxu0 0.0
    %920 = vmatprep.subr.mxu0 0.0
    %921 = vmatpush1.msra.mxu0 0.0
    %922 = vmatprep.subr.mxu0 0.0
    %923 = vmatpush1.msra.mxu0 0.0
    %924 = vmatprep.subr.mxu0 0.0
    %925 = vmatpush1.msra.mxu0 0.0
    %926 = vmatprep.subr.mxu0 0.0
    %927 = vmatpush1.msra.mxu0 0.0
    %928 = vmatprep.subr.mxu0 0.0
    %929 = vmatpush1.msra.mxu0 0.0
    %930 = vmatprep.subr.mxu0 0.0
    %931 = vmatpush1.msra.mxu0 0.0
    %932 = vmatprep.subr.mxu0 0.0
    %933 = vmatpush1.msra.mxu0 0.0
    %934 = vmatprep.subr.mxu0 0.0
    %935 = vmatpush1.msra.mxu0 0.0
    %936 = vmatprep.subr.mxu0 0.0
    %937 = vmatpush1.msra.mxu0 0.0
    %938 = vmatprep.subr.mxu0 0.0
    %939 = vmatpush1.msra.mxu0 0.0
    %940 = vmatprep.subr.mxu0 0.0
    %941 = vmatpush1.msra.mxu0 0.0
    %942 = vmatprep.subr.mxu0 0.0
    %943 = vmatpush1.msra.mxu0 0.0
    %944 = vmatprep.mubr.f32.mxu0 0.0
    %945 = vmatmul.mubr.f32.gmra.mrb[0].mxu0 %v802
    %v946 = vpop.f32.mrb[0].mxu0
    %v947 = vadd.f32 0.0, %v946
    %v948 = vpop.f32.mrb[0].mxu0
    %949 = vdwg.mxu0
    %v950 = vadd.f32 %v806, %v876
    %v951 = vxor.u32 %v950, 2147483648
    %v952 = vmul.f32 %v951, 1.442695
    %v953 = vpow.pop %v952
    %v954 = vadd.f32 %v953, 1.0
    %v955 = vrcp.pop %v954
    %v956 = vmul.f32 1.0, %v955
    %v957 = vadd.f32 %v807, %v878
    %v958 = vxor.u32 %v957, 2147483648
    %v959 = vmul.f32 %v958, 1.442695
    %v960 = vpow.pop %v959
    %v961 = vadd.f32 %v960, 1.0
    %v962 = vrcp.pop %v961
    %v963 = vmul.f32 1.0, %v962
    %v964 = vadd.f32 %v947, %v264
    %v965 = vmul.f32 %v956, %v964
    %v966 = vadd.f32 %v808, %v965
    %v967 = vtanh.pop %v966
    %v968 = vsub.f32 1.0, %v963
    %v969 = vmul.f32 %v968, %v967
    %v970 = vmul.f32 %v963, %v802
    %v971 = vadd.f32 %v969, %v970
    %s972 = sadd.s32 %s100, 4
    %p973 = scmp.lt.s32.totalorder %s972, 8
    %s974 = scalar_select %p973, 1, 0
    %v975 = vstv %s974
    %vm976 = vcmp.eq.s32.totalorder %v975, 1
    %v977 = vsel %vm976, %v971, %v802
    %s978 = scalar_lea.vmem [#allocation8], 32
    %979 = vst [vmem:[%s978] sm:$0xff] %v977
    %s980 = scalar_lea.vmem [#allocation3], 120
    %v981 = vld [vmem:[%s980] sm:$0xff]
    %v982 = vld [vmem:[%s980 + $0x8] sm:$0xff]
    %v983 = vld [vmem:[%s980 + $0x10] sm:$0xff]
    %984 = vmatprep.subr.mxu0 %v52
    %985 = vmatpush1.msra.mxu0 %v51
    %986 = vmatprep.subr.mxu0 %v55
    %987 = vmatpush1.msra.mxu0 %v54
    %988 = vmatprep.subr.mxu0 %v58
    %989 = vmatpush1.msra.mxu0 %v57
    %990 = vmatprep.subr.mxu0 %v61
    %991 = vmatpush1.msra.mxu0 %v60
    %992 = vmatprep.subr.mxu0 %v64
    %993 = vmatpush1.msra.mxu0 %v63
    %994 = vmatprep.subr.mxu0 %v67
    %995 = vmatpush1.msra.mxu0 %v66
    %996 = vmatprep.subr.mxu0 %v70
    %997 = vmatpush1.msra.mxu0 %v69
    %998 = vmatprep.subr.mxu0 %v73
    %999 = vmatpush1.msra.mxu0 %v72
    %1000 = vmatprep.subr.mxu0 %v76
    %1001 = vmatpush1.msra.mxu0 %v75
    %1002 = vmatprep.subr.mxu0 %v79
    %1003 = vmatpush1.msra.mxu0 %v78
    %1004 = vmatprep.subr.mxu0 %v82
    %1005 = vmatpush1.msra.mxu0 %v81
    %1006 = vmatprep.subr.mxu0 %v85
    %1007 = vmatpush1.msra.mxu0 %v84
    %1008 = vmatprep.subr.mxu0 %v88
    %1009 = vmatpush1.msra.mxu0 %v87
    %1010 = vmatprep.subr.mxu0 %v91
    %1011 = vmatpush1.msra.mxu0 %v90
    %1012 = vmatprep.subr.mxu0 %v94
    %1013 = vmatpush1.msra.mxu0 %v93
    %1014 = vmatprep.subr.mxu0 %v97
    %1015 = vmatpush1.msra.mxu0 %v96
    %1016 = vmatprep.subr.mxu0 0.0
    %1017 = vmatpush1.msra.mxu0 0.0
    %1018 = vmatprep.subr.mxu0 0.0
    %1019 = vmatpush1.msra.mxu0 0.0
    %1020 = vmatprep.subr.mxu0 0.0
    %1021 = vmatpush1.msra.mxu0 0.0
    %1022 = vmatprep.subr.mxu0 0.0
    %1023 = vmatpush1.msra.mxu0 0.0
    %1024 = vmatprep.subr.mxu0 0.0
    %1025 = vmatpush1.msra.mxu0 0.0
    %1026 = vmatprep.subr.mxu0 0.0
    %1027 = vmatpush1.msra.mxu0 0.0
    %1028 = vmatprep.subr.mxu0 0.0
    %1029 = vmatpush1.msra.mxu0 0.0
    %1030 = vmatprep.subr.mxu0 0.0
    %1031 = vmatpush1.msra.mxu0 0.0
    %1032 = vmatprep.subr.mxu0 0.0
    %1033 = vmatpush1.msra.mxu0 0.0
    %1034 = vmatprep.subr.mxu0 0.0
    %1035 = vmatpush1.msra.mxu0 0.0
    %1036 = vmatprep.subr.mxu0 0.0
    %1037 = vmatpush1.msra.mxu0 0.0
    %1038 = vmatprep.subr.mxu0 0.0
    %1039 = vmatpush1.msra.mxu0 0.0
    %1040 = vmatprep.subr.mxu0 0.0
    %1041 = vmatpush1.msra.mxu0 0.0
    %1042 = vmatprep.subr.mxu0 0.0
    %1043 = vmatpush1.msra.mxu0 0.0
    %1044 = vmatprep.subr.mxu0 0.0
    %1045 = vmatpush1.msra.mxu0 0.0
    %1046 = vmatprep.subr.mxu0 0.0
    %1047 = vmatpush1.msra.mxu0 0.0
    %1048 = vmatprep.mubr.f32.mxu0 0.0
    %1049 = vmatmul.mubr.f32.gmra.mrb[0].mxu0 %v977
    %v1050 = vpop.f32.mrb[0].mxu0
    %v1051 = vadd.f32 0.0, %v1050
    %v1052 = vpop.f32.mrb[0].mxu0
    %v1053 = vadd.f32 0.0, %v1052
    %1054 = vdwg.mxu0
    %1055 = vmatprep.subr.mxu0 0.0
    %1056 = vmatpush1.msra.mxu0 %v53
    %1057 = vmatprep.subr.mxu0 0.0
    %1058 = vmatpush1.msra.mxu0 %v56
    %1059 = vmatprep.subr.mxu0 0.0
    %1060 = vmatpush1.msra.mxu0 %v59
    %1061 = vmatprep.subr.mxu0 0.0
    %1062 = vmatpush1.msra.mxu0 %v62
    %1063 = vmatprep.subr.mxu0 0.0
    %1064 = vmatpush1.msra.mxu0 %v65
    %1065 = vmatprep.subr.mxu0 0.0
    %1066 = vmatpush1.msra.mxu0 %v68
    %1067 = vmatprep.subr.mxu0 0.0
    %1068 = vmatpush1.msra.mxu0 %v71
    %1069 = vmatprep.subr.mxu0 0.0
    %1070 = vmatpush1.msra.mxu0 %v74
    %1071 = vmatprep.subr.mxu0 0.0
    %1072 = vmatpush1.msra.mxu0 %v77
    %1073 = vmatprep.subr.mxu0 0.0
    %1074 = vmatpush1.msra.mxu0 %v80
    %1075 = vmatprep.subr.mxu0 0.0
    %1076 = vmatpush1.msra.mxu0 %v83
    %1077 = vmatprep.subr.mxu0 0.0
    %1078 = vmatpush1.msra.mxu0 %v86
    %1079 = vmatprep.subr.mxu0 0.0
    %1080 = vmatpush1.msra.mxu0 %v89
    %1081 = vmatprep.subr.mxu0 0.0
    %1082 = vmatpush1.msra.mxu0 %v92
    %1083 = vmatprep.subr.mxu0 0.0
    %1084 = vmatpush1.msra.mxu0 %v95
    %1085 = vmatprep.subr.mxu0 0.0
    %1086 = vmatpush1.msra.mxu0 %v98
    %1087 = vmatprep.subr.mxu0 0.0
    %1088 = vmatpush1.msra.mxu0 0.0
    %1089 = vmatprep.subr.mxu0 0.0
    %1090 = vmatpush1.msra.mxu0 0.0
    %1091 = vmatprep.subr.mxu0 0.0
    %1092 = vmatpush1.msra.mxu0 0.0
    %1093 = vmatprep.subr.mxu0 0.0
    %1094 = vmatpush1.msra.mxu0 0.0
    %1095 = vmatprep.subr.mxu0 0.0
    %1096 = vmatpush1.msra.mxu0 0.0
    %1097 = vmatprep.subr.mxu0 0.0
    %1098 = vmatpush1.msra.mxu0 0.0
    %1099 = vmatprep.subr.mxu0 0.0
    %1100 = vmatpush1.msra.mxu0 0.0
    %1101 = vmatprep.subr.mxu0 0.0
    %1102 = vmatpush1.msra.mxu0 0.0
    %1103 = vmatprep.subr.mxu0 0.0
    %1104 = vmatpush1.msra.mxu0 0.0
    %1105 = vmatprep.subr.mxu0 0.0
    %1106 = vmatpush1.msra.mxu0 0.0
    %1107 = vmatprep.subr.mxu0 0.0
    %1108 = vmatpush1.msra.mxu0 0.0
    %1109 = vmatprep.subr.mxu0 0.0
    %1110 = vmatpush1.msra.mxu0 0.0
    %1111 = vmatprep.subr.mxu0 0.0
    %1112 = vmatpush1.msra.mxu0 0.0
    %1113 = vmatprep.subr.mxu0 0.0
    %1114 = vmatpush1.msra.mxu0 0.0
    %1115 = vmatprep.subr.mxu0 0.0
    %1116 = vmatpush1.msra.mxu0 0.0
    %1117 = vmatprep.subr.mxu0 0.0
    %1118 = vmatpush1.msra.mxu0 0.0
    %1119 = vmatprep.mubr.f32.mxu0 0.0
    %1120 = vmatmul.mubr.f32.gmra.mrb[0].mxu0 %v977
    %v1121 = vpop.f32.mrb[0].mxu0
    %v1122 = vadd.f32 0.0, %v1121
    %v1123 = vpop.f32.mrb[0].mxu0
    %1124 = vdwg.mxu0
    %v1125 = vadd.f32 %v981, %v1051
    %v1126 = vxor.u32 %v1125, 2147483648
    %v1127 = vmul.f32 %v1126, 1.442695
    %v1128 = vpow.pop %v1127
    %v1129 = vadd.f32 %v1128, 1.0
    %v1130 = vrcp.pop %v1129
    %v1131 = vmul.f32 1.0, %v1130
    %v1132 = vadd.f32 %v982, %v1053
    %v1133 = vxor.u32 %v1132, 2147483648
    %v1134 = vmul.f32 %v1133, 1.442695
    %v1135 = vpow.pop %v1134
    %v1136 = vadd.f32 %v1135, 1.0
    %v1137 = vrcp.pop %v1136
    %v1138 = vmul.f32 1.0, %v1137
    %v1139 = vadd.f32 %v1122, %v264
    %v1140 = vmul.f32 %v1131, %v1139
    %v1141 = vadd.f32 %v983, %v1140
    %v1142 = vtanh.pop %v1141
    %v1143 = vsub.f32 1.0, %v1138
    %v1144 = vmul.f32 %v1143, %v1142
    %v1145 = vmul.f32 %v1138, %v977
    %v1146 = vadd.f32 %v1144, %v1145
    %s1147 = sadd.s32 %s100, 5
    %p1148 = scmp.lt.s32.totalorder %s1147, 8
    %s1149 = scalar_select %p1148, 1, 0
    %v1150 = vstv %s1149
    %vm1151 = vcmp.eq.s32.totalorder %v1150, 1
    %v1152 = vsel %vm1151, %v1146, %v977
    %s1153 = scalar_lea.vmem [#allocation8], 40
    %1154 = vst [vmem:[%s1153] sm:$0xff] %v1152
    %s1155 = scalar_lea.vmem [#allocation3], 144
    %v1156 = vld [vmem:[%s1155] sm:$0xff]
    %v1157 = vld [vmem:[%s1155 + $0x8] sm:$0xff]
    %v1158 = vld [vmem:[%s1155 + $0x10] sm:$0xff]
    %1159 = vmatprep.subr.mxu0 %v52
    %1160 = vmatpush1.msra.mxu0 %v51
    %1161 = vmatprep.subr.mxu0 %v55
    %1162 = vmatpush1.msra.mxu0 %v54
    %1163 = vmatprep.subr.mxu0 %v58
    %1164 = vmatpush1.msra.mxu0 %v57
    %1165 = vmatprep.subr.mxu0 %v61
    %1166 = vmatpush1.msra.mxu0 %v60
    %1167 = vmatprep.subr.mxu0 %v64
    %1168 = vmatpush1.msra.mxu0 %v63
    %1169 = vmatprep.subr.mxu0 %v67
    %1170 = vmatpush1.msra.mxu0 %v66
    %1171 = vmatprep.subr.mxu0 %v70
    %1172 = vmatpush1.msra.mxu0 %v69
    %1173 = vmatprep.subr.mxu0 %v73
    %1174 = vmatpush1.msra.mxu0 %v72
    %1175 = vmatprep.subr.mxu0 %v76
    %1176 = vmatpush1.msra.mxu0 %v75
    %1177 = vmatprep.subr.mxu0 %v79
    %1178 = vmatpush1.msra.mxu0 %v78
    %1179 = vmatprep.subr.mxu0 %v82
    %1180 = vmatpush1.msra.mxu0 %v81
    %1181 = vmatprep.subr.mxu0 %v85
    %1182 = vmatpush1.msra.mxu0 %v84
    %1183 = vmatprep.subr.mxu0 %v88
    %1184 = vmatpush1.msra.mxu0 %v87
    %1185 = vmatprep.subr.mxu0 %v91
    %1186 = vmatpush1.msra.mxu0 %v90
    %1187 = vmatprep.subr.mxu0 %v94
    %1188 = vmatpush1.msra.mxu0 %v93
    %1189 = vmatprep.subr.mxu0 %v97
    %1190 = vmatpush1.msra.mxu0 %v96
    %1191 = vmatprep.subr.mxu0 0.0
    %1192 = vmatpush1.msra.mxu0 0.0
    %1193 = vmatprep.subr.mxu0 0.0
    %1194 = vmatpush1.msra.mxu0 0.0
    %1195 = vmatprep.subr.mxu0 0.0
    %1196 = vmatpush1.msra.mxu0 0.0
    %1197 = vmatprep.subr.mxu0 0.0
    %1198 = vmatpush1.msra.mxu0 0.0
    %1199 = vmatprep.subr.mxu0 0.0
    %1200 = vmatpush1.msra.mxu0 0.0
    %1201 = vmatprep.subr.mxu0 0.0
    %1202 = vmatpush1.msra.mxu0 0.0
    %1203 = vmatprep.subr.mxu0 0.0
    %1204 = vmatpush1.msra.mxu0 0.0
    %1205 = vmatprep.subr.mxu0 0.0
    %1206 = vmatpush1.msra.mxu0 0.0
    %1207 = vmatprep.subr.mxu0 0.0
    %1208 = vmatpush1.msra.mxu0 0.0
    %1209 = vmatprep.subr.mxu0 0.0
    %1210 = vmatpush1.msra.mxu0 0.0
    %1211 = vmatprep.subr.mxu0 0.0
    %1212 = vmatpush1.msra.mxu0 0.0
    %1213 = vmatprep.subr.mxu0 0.0
    %1214 = vmatpush1.msra.mxu0 0.0
    %1215 = vmatprep.subr.mxu0 0.0
    %1216 = vmatpush1.msra.mxu0 0.0
    %1217 = vmatprep.subr.mxu0 0.0
    %1218 = vmatpush1.msra.mxu0 0.0
    %1219 = vmatprep.subr.mxu0 0.0
    %1220 = vmatpush1.msra.mxu0 0.0
    %1221 = vmatprep.subr.mxu0 0.0
    %1222 = vmatpush1.msra.mxu0 0.0
    %1223 = vmatprep.mubr.f32.mxu0 0.0
    %1224 = vmatmul.mubr.f32.gmra.mrb[0].mxu0 %v1152
    %v1225 = vpop.f32.mrb[0].mxu0
    %v1226 = vadd.f32 0.0, %v1225
    %v1227 = vpop.f32.mrb[0].mxu0
    %v1228 = vadd.f32 0.0, %v1227
    %1229 = vdwg.mxu0
    %1230 = vmatprep.subr.mxu0 0.0
    %1231 = vmatpush1.msra.mxu0 %v53
    %1232 = vmatprep.subr.mxu0 0.0
    %1233 = vmatpush1.msra.mxu0 %v56
    %1234 = vmatprep.subr.mxu0 0.0
    %1235 = vmatpush1.msra.mxu0 %v59
    %1236 = vmatprep.subr.mxu0 0.0
    %1237 = vmatpush1.msra.mxu0 %v62
    %1238 = vmatprep.subr.mxu0 0.0
    %1239 = vmatpush1.msra.mxu0 %v65
    %1240 = vmatprep.subr.mxu0 0.0
    %1241 = vmatpush1.msra.mxu0 %v68
    %1242 = vmatprep.subr.mxu0 0.0
    %1243 = vmatpush1.msra.mxu0 %v71
    %1244 = vmatprep.subr.mxu0 0.0
    %1245 = vmatpush1.msra.mxu0 %v74
    %1246 = vmatprep.subr.mxu0 0.0
    %1247 = vmatpush1.msra.mxu0 %v77
    %1248 = vmatprep.subr.mxu0 0.0
    %1249 = vmatpush1.msra.mxu0 %v80
    %1250 = vmatprep.subr.mxu0 0.0
    %1251 = vmatpush1.msra.mxu0 %v83
    %1252 = vmatprep.subr.mxu0 0.0
    %1253 = vmatpush1.msra.mxu0 %v86
    %1254 = vmatprep.subr.mxu0 0.0
    %1255 = vmatpush1.msra.mxu0 %v89
    %1256 = vmatprep.subr.mxu0 0.0
    %1257 = vmatpush1.msra.mxu0 %v92
    %1258 = vmatprep.subr.mxu0 0.0
    %1259 = vmatpush1.msra.mxu0 %v95
    %1260 = vmatprep.subr.mxu0 0.0
    %1261 = vmatpush1.msra.mxu0 %v98
    %1262 = vmatprep.subr.mxu0 0.0
    %1263 = vmatpush1.msra.mxu0 0.0
    %1264 = vmatprep.subr.mxu0 0.0
    %1265 = vmatpush1.msra.mxu0 0.0
    %1266 = vmatprep.subr.mxu0 0.0
    %1267 = vmatpush1.msra.mxu0 0.0
    %1268 = vmatprep.subr.mxu0 0.0
    %1269 = vmatpush1.msra.mxu0 0.0
    %1270 = vmatprep.subr.mxu0 0.0
    %1271 = vmatpush1.msra.mxu0 0.0
    %1272 = vmatprep.subr.mxu0 0.0
    %1273 = vmatpush1.msra.mxu0 0.0
    %1274 = vmatprep.subr.mxu0 0.0
    %1275 = vmatpush1.msra.mxu0 0.0
    %1276 = vmatprep.subr.mxu0 0.0
    %1277 = vmatpush1.msra.mxu0 0.0
    %1278 = vmatprep.subr.mxu0 0.0
    %1279 = vmatpush1.msra.mxu0 0.0
    %1280 = vmatprep.subr.mxu0 0.0
    %1281 = vmatpush1.msra.mxu0 0.0
    %1282 = vmatprep.subr.mxu0 0.0
    %1283 = vmatpush1.msra.mxu0 0.0
    %1284 = vmatprep.subr.mxu0 0.0
    %1285 = vmatpush1.msra.mxu0 0.0
    %1286 = vmatprep.subr.mxu0 0.0
    %1287 = vmatpush1.msra.mxu0 0.0
    %1288 = vmatprep.subr.mxu0 0.0
    %1289 = vmatpush1.msra.mxu0 0.0
    %1290 = vmatprep.subr.mxu0 0.0
    %1291 = vmatpush1.msra.mxu0 0.0
    %1292 = vmatprep.subr.mxu0 0.0
    %1293 = vmatpush1.msra.mxu0 0.0
    %1294 = vmatprep.mubr.f32.mxu0 0.0
    %1295 = vmatmul.mubr.f32.gmra.mrb[0].mxu0 %v1152
    %v1296 = vpop.f32.mrb[0].mxu0
    %v1297 = vadd.f32 0.0, %v1296
    %v1298 = vpop.f32.mrb[0].mxu0
    %1299 = vdwg.mxu0
    %v1300 = vadd.f32 %v1156, %v1226
    %v1301 = vxor.u32 %v1300, 2147483648
    %v1302 = vmul.f32 %v1301, 1.442695
    %v1303 = vpow.pop %v1302
    %v1304 = vadd.f32 %v1303, 1.0
    %v1305 = vrcp.pop %v1304
    %v1306 = vmul.f32 1.0, %v1305
    %v1307 = vadd.f32 %v1157, %v1228
    %v1308 = vxor.u32 %v1307, 2147483648
    %v1309 = vmul.f32 %v1308, 1.442695
    %v1310 = vpow.pop %v1309
    %v1311 = vadd.f32 %v1310, 1.0
    %v1312 = vrcp.pop %v1311
    %v1313 = vmul.f32 1.0, %v1312
    %v1314 = vadd.f32 %v1297, %v264
    %v1315 = vmul.f32 %v1306, %v1314
    %v1316 = vadd.f32 %v1158, %v1315
    %v1317 = vtanh.pop %v1316
    %v1318 = vsub.f32 1.0, %v1313
    %v1319 = vmul.f32 %v1318, %v1317
    %v1320 = vmul.f32 %v1313, %v1152
    %v1321 = vadd.f32 %v1319, %v1320
    %s1322 = sadd.s32 %s100, 6
    %p1323 = scmp.lt.s32.totalorder %s1322, 8
    %s1324 = scalar_select %p1323, 1, 0
    %v1325 = vstv %s1324
    %vm1326 = vcmp.eq.s32.totalorder %v1325, 1
    %v1327 = vsel %vm1326, %v1321, %v1152
    %s1328 = scalar_lea.vmem [#allocation8], 48
    %1329 = vst [vmem:[%s1328] sm:$0xff] %v1327
    %s1330 = scalar_lea.vmem [#allocation3], 168
    %v1331 = vld [vmem:[%s1330] sm:$0xff]
    %v1332 = vld [vmem:[%s1330 + $0x8] sm:$0xff]
    %v1333 = vld [vmem:[%s1330 + $0x10] sm:$0xff]
    %1334 = vmatprep.subr.mxu0 %v52
    %1335 = vmatpush1.msra.mxu0 %v51
    %1336 = vmatprep.subr.mxu0 %v55
    %1337 = vmatpush1.msra.mxu0 %v54
    %1338 = vmatprep.subr.mxu0 %v58
    %1339 = vmatpush1.msra.mxu0 %v57
    %1340 = vmatprep.subr.mxu0 %v61
    %1341 = vmatpush1.msra.mxu0 %v60
    %1342 = vmatprep.subr.mxu0 %v64
    %1343 = vmatpush1.msra.mxu0 %v63
    %1344 = vmatprep.subr.mxu0 %v67
    %1345 = vmatpush1.msra.mxu0 %v66
    %1346 = vmatprep.subr.mxu0 %v70
    %1347 = vmatpush1.msra.mxu0 %v69
    %1348 = vmatprep.subr.mxu0 %v73
    %1349 = vmatpush1.msra.mxu0 %v72
    %1350 = vmatprep.subr.mxu0 %v76
    %1351 = vmatpush1.msra.mxu0 %v75
    %1352 = vmatprep.subr.mxu0 %v79
    %1353 = vmatpush1.msra.mxu0 %v78
    %1354 = vmatprep.subr.mxu0 %v82
    %1355 = vmatpush1.msra.mxu0 %v81
    %1356 = vmatprep.subr.mxu0 %v85
    %1357 = vmatpush1.msra.mxu0 %v84
    %1358 = vmatprep.subr.mxu0 %v88
    %1359 = vmatpush1.msra.mxu0 %v87
    %1360 = vmatprep.subr.mxu0 %v91
    %1361 = vmatpush1.msra.mxu0 %v90
    %1362 = vmatprep.subr.mxu0 %v94
    %1363 = vmatpush1.msra.mxu0 %v93
    %1364 = vmatprep.subr.mxu0 %v97
    %1365 = vmatpush1.msra.mxu0 %v96
    %1366 = vmatprep.subr.mxu0 0.0
    %1367 = vmatpush1.msra.mxu0 0.0
    %1368 = vmatprep.subr.mxu0 0.0
    %1369 = vmatpush1.msra.mxu0 0.0
    %1370 = vmatprep.subr.mxu0 0.0
    %1371 = vmatpush1.msra.mxu0 0.0
    %1372 = vmatprep.subr.mxu0 0.0
    %1373 = vmatpush1.msra.mxu0 0.0
    %1374 = vmatprep.subr.mxu0 0.0
    %1375 = vmatpush1.msra.mxu0 0.0
    %1376 = vmatprep.subr.mxu0 0.0
    %1377 = vmatpush1.msra.mxu0 0.0
    %1378 = vmatprep.subr.mxu0 0.0
    %1379 = vmatpush1.msra.mxu0 0.0
    %1380 = vmatprep.subr.mxu0 0.0
    %1381 = vmatpush1.msra.mxu0 0.0
    %1382 = vmatprep.subr.mxu0 0.0
    %1383 = vmatpush1.msra.mxu0 0.0
    %1384 = vmatprep.subr.mxu0 0.0
    %1385 = vmatpush1.msra.mxu0 0.0
    %1386 = vmatprep.subr.mxu0 0.0
    %1387 = vmatpush1.msra.mxu0 0.0
    %1388 = vmatprep.subr.mxu0 0.0
    %1389 = vmatpush1.msra.mxu0 0.0
    %1390 = vmatprep.subr.mxu0 0.0
    %1391 = vmatpush1.msra.mxu0 0.0
    %1392 = vmatprep.subr.mxu0 0.0
    %1393 = vmatpush1.msra.mxu0 0.0
    %1394 = vmatprep.subr.mxu0 0.0
    %1395 = vmatpush1.msra.mxu0 0.0
    %1396 = vmatprep.subr.mxu0 0.0
    %1397 = vmatpush1.msra.mxu0 0.0
    %1398 = vmatprep.mubr.f32.mxu0 0.0
    %1399 = vmatmul.mubr.f32.gmra.mrb[0].mxu0 %v1327
    %v1400 = vpop.f32.mrb[0].mxu0
    %v1401 = vadd.f32 0.0, %v1400
    %v1402 = vpop.f32.mrb[0].mxu0
    %v1403 = vadd.f32 0.0, %v1402
    %1404 = vdwg.mxu0
    %1405 = vmatprep.subr.mxu0 0.0
    %1406 = vmatpush1.msra.mxu0 %v53
    %1407 = vmatprep.subr.mxu0 0.0
    %1408 = vmatpush1.msra.mxu0 %v56
    %1409 = vmatprep.subr.mxu0 0.0
    %1410 = vmatpush1.msra.mxu0 %v59
    %1411 = vmatprep.subr.mxu0 0.0
    %1412 = vmatpush1.msra.mxu0 %v62
    %1413 = vmatprep.subr.mxu0 0.0
    %1414 = vmatpush1.msra.mxu0 %v65
    %1415 = vmatprep.subr.mxu0 0.0
    %1416 = vmatpush1.msra.mxu0 %v68
    %1417 = vmatprep.subr.mxu0 0.0
    %1418 = vmatpush1.msra.mxu0 %v71
    %1419 = vmatprep.subr.mxu0 0.0
    %1420 = vmatpush1.msra.mxu0 %v74
    %1421 = vmatprep.subr.mxu0 0.0
    %1422 = vmatpush1.msra.mxu0 %v77
    %1423 = vmatprep.subr.mxu0 0.0
    %1424 = vmatpush1.msra.mxu0 %v80
    %1425 = vmatprep.subr.mxu0 0.0
    %1426 = vmatpush1.msra.mxu0 %v83
    %1427 = vmatprep.subr.mxu0 0.0
    %1428 = vmatpush1.msra.mxu0 %v86
    %1429 = vmatprep.subr.mxu0 0.0
    %1430 = vmatpush1.msra.mxu0 %v89
    %1431 = vmatprep.subr.mxu0 0.0
    %1432 = vmatpush1.msra.mxu0 %v92
    %1433 = vmatprep.subr.mxu0 0.0
    %1434 = vmatpush1.msra.mxu0 %v95
    %1435 = vmatprep.subr.mxu0 0.0
    %1436 = vmatpush1.msra.mxu0 %v98
    %1437 = vmatprep.subr.mxu0 0.0
    %1438 = vmatpush1.msra.mxu0 0.0
    %1439 = vmatprep.subr.mxu0 0.0
    %1440 = vmatpush1.msra.mxu0 0.0
    %1441 = vmatprep.subr.mxu0 0.0
    %1442 = vmatpush1.msra.mxu0 0.0
    %1443 = vmatprep.subr.mxu0 0.0
    %1444 = vmatpush1.msra.mxu0 0.0
    %1445 = vmatprep.subr.mxu0 0.0
    %1446 = vmatpush1.msra.mxu0 0.0
    %1447 = vmatprep.subr.mxu0 0.0
    %1448 = vmatpush1.msra.mxu0 0.0
    %1449 = vmatprep.subr.mxu0 0.0
    %1450 = vmatpush1.msra.mxu0 0.0
    %1451 = vmatprep.subr.mxu0 0.0
    %1452 = vmatpush1.msra.mxu0 0.0
    %1453 = vmatprep.subr.mxu0 0.0
    %1454 = vmatpush1.msra.mxu0 0.0
    %1455 = vmatprep.subr.mxu0 0.0
    %1456 = vmatpush1.msra.mxu0 0.0
    %1457 = vmatprep.subr.mxu0 0.0
    %1458 = vmatpush1.msra.mxu0 0.0
    %1459 = vmatprep.subr.mxu0 0.0
    %1460 = vmatpush1.msra.mxu0 0.0
    %1461 = vmatprep.subr.mxu0 0.0
    %1462 = vmatpush1.msra.mxu0 0.0
    %1463 = vmatprep.subr.mxu0 0.0
    %1464 = vmatpush1.msra.mxu0 0.0
    %1465 = vmatprep.subr.mxu0 0.0
    %1466 = vmatpush1.msra.mxu0 0.0
    %1467 = vmatprep.subr.mxu0 0.0
    %1468 = vmatpush1.msra.mxu0 0.0
    %1469 = vmatprep.mubr.f32.mxu0 0.0
    %1470 = vmatmul.mubr.f32.gmra.mrb[0].mxu0 %v1327
    %v1471 = vpop.f32.mrb[0].mxu0
    %v1472 = vadd.f32 0.0, %v1471
    %v1473 = vpop.f32.mrb[0].mxu0
    %1474 = vdwg.mxu0
    %v1475 = vadd.f32 %v1331, %v1401
    %v1476 = vxor.u32 %v1475, 2147483648
    %v1477 = vmul.f32 %v1476, 1.442695
    %v1478 = vpow.pop %v1477
    %v1479 = vadd.f32 %v1478, 1.0
    %v1480 = vrcp.pop %v1479
    %v1481 = vmul.f32 1.0, %v1480
    %v1482 = vadd.f32 %v1332, %v1403
    %v1483 = vxor.u32 %v1482, 2147483648
    %v1484 = vmul.f32 %v1483, 1.442695
    %v1485 = vpow.pop %v1484
    %v1486 = vadd.f32 %v1485, 1.0
    %v1487 = vrcp.pop %v1486
    %v1488 = vmul.f32 1.0, %v1487
    %v1489 = vadd.f32 %v1472, %v264
    %v1490 = vmul.f32 %v1481, %v1489
    %v1491 = vadd.f32 %v1333, %v1490
    %v1492 = vtanh.pop %v1491
    %v1493 = vsub.f32 1.0, %v1488
    %v1494 = vmul.f32 %v1493, %v1492
    %v1495 = vmul.f32 %v1488, %v1327
    %v1496 = vadd.f32 %v1494, %v1495
    %s1497 = sadd.s32 %s100, 7
    %p1498 = scmp.lt.s32.totalorder %s1497, 8
    %s1499 = scalar_select %p1498, 1, 0
    %v1500 = vstv %s1499
    %vm1501 = vcmp.eq.s32.totalorder %v1500, 1
    %v1502 = vsel %vm1501, %v1496, %v1327
    %s1503 = scalar_lea.vmem [#allocation8], 56
    %1504 = vst [vmem:[%s1503] sm:$0xff] %v1502
    %1505 = vst [vmem:[#allocation2] sm:$0xff] %v1502
    // Predicated region
    $region26: #{tpu_custom_call.1} parent=1 // pred_check
      %p1506 = pneg %p46
    $region27: #{tpu_custom_call.1} parent=1 // pred_check_branch
      %1508 = sbr.rel (%p1506) target = $region29
    $region28: #{tpu_custom_call.1} parent=1 // pred_region
      %1509 = vst [vmem:[#allocation9] sm:$0xff] %v1502
    $region29: #{tpu_custom_call.1} parent=1 // pred_fallthru
      _
    // Predicated region
    $region30: #{tpu_custom_call.1} parent=1 // pred_check
      _
    $region31: #{tpu_custom_call.1} parent=1 // pred_check_branch
      %1511 = sbr.rel (0) target = $region33
    $region32: #{tpu_custom_call.1} parent=1 // pred_region
      %s1513 = ssub.s32 1024, 1024
      %1514 = vsyncadd [#allocation5], %s1513
      %s1515 = sshll.u32 [#allocation8], 4
      %s1516 = int_to_ptr.vmem [resolvable:$true] %s1515
      %1521 = dma.vmem_to_hbm [thread:$0]  %s1516, 1024, %s3, [#allocation5], 128, 128, 8
    $region33: #{tpu_custom_call.1} parent=1 // pred_fallthru
      _
    // Predicated region
    $region34: #{tpu_custom_call.1} parent=1 // pred_check
      _
    $region35: #{tpu_custom_call.1} parent=1 // pred_check_branch
      %1523 = sbr.rel (0) target = $region37
    $region36: #{tpu_custom_call.1} parent=1 // pred_region
      %s1525 = ssub.s32 128, 128
      %1526 = vsyncadd [#allocation10], %s1525
      %s1528 = sshll.u32 [#allocation9], 4
      %s1529 = int_to_ptr.vmem [resolvable:$true] %s1528
      %1531 = dma.vmem_to_hbm [thread:$0]  %s1529, 128, %s4, [#allocation10]
    $region37: #{tpu_custom_call.1} parent=1 // pred_fallthru
      _
    // Predicated region
    $region38: #{tpu_custom_call.1} parent=1 // pred_check
      _
    $region39: #{tpu_custom_call.1} parent=1 // pred_check_branch
      %1533 = sbr.rel (0) target = $region41
    $region40: #{tpu_custom_call.1} parent=1 // pred_region
      %1534 = dma.done [#allocation5], 1024
    $region41: #{tpu_custom_call.1} parent=1 // pred_fallthru
      _
    // Predicated region
    $region42: #{tpu_custom_call.1} parent=1 // pred_check
      _
    $region43: #{tpu_custom_call.1} parent=1 // pred_check_branch
      %1536 = sbr.rel (0) target = $region45
    $region44: #{tpu_custom_call.1} parent=1 // pred_region
      %1537 = dma.done [#allocation10], 128
    $region45: #{tpu_custom_call.1} parent=1 // pred_fallthru
      _
    %1538 = vsyncpa [#allocation4], 1
    %1539 = vsyncpa [#allocation7], 1
    %1540 = vsyncpa [#allocation5], 1
    %1541 = vsyncpa [#allocation10], 1

</llo_original>
